<compile_context>
chip_gen: v5e
topology: v5e:2x2
jax: 0.10.0
libtpu: 0.0.40
codegen_flags: <defaults>
</compile_context>

<pallas_src>
import functools
import math

import jax
import jax.numpy as jnp
import numpy as np
from jax.experimental import pallas as pl
from jax.experimental.pallas import tpu as pltpu


def _mha_kernel(x_ref, mask_ref,
                wq_ref, bq_ref, wk_ref, bk_ref, wv_ref, bv_ref,
                wo_ref, bo_ref, gamma_ref, beta_ref,
                out_ref, attn_ref,
                *, batch_block, d_k, d_v, n_heads, matmul_dtype):
    scale = jnp.float32(1.0 / math.sqrt(d_k))

    for bb in range(batch_block):                      # static (usually 1)
        x = x_ref[bb]                                  # (S, d_model) f32
        x_mm = x.astype(matmul_dtype)                  # MXU operand dtype
        masked = mask_ref[bb] != 0                     # (S, S) bool, once

        S = x.shape[0]
        proj = jnp.zeros((S, d_v), jnp.float32)        # output-proj accumulator

        for h in range(n_heads):                       # static unrolled head loop
            # Per-head projections: lane-dense (d_model, d_head) weight slabs,
            # f32 accumulation, bias added in f32.
            q = jnp.dot(x_mm, wq_ref[h], preferred_element_type=jnp.float32) + bq_ref[h]
            k = jnp.dot(x_mm, wk_ref[h], preferred_element_type=jnp.float32) + bk_ref[h]
            v = jnp.dot(x_mm, wv_ref[h], preferred_element_type=jnp.float32) + bv_ref[h]
            q = q * scale                              # scale Q once (S*d_k muls)

            s = jnp.dot(q.astype(matmul_dtype), k.astype(matmul_dtype).T,
                        preferred_element_type=jnp.float32)          # (S, S)
            # Exact masked_fill(-1e9) semantics (matches torch, incl. fully
            # masked rows -> uniform softmax).
            s = jnp.where(masked, jnp.float32(-1e9), s)

            # Numerically stable softmax; reciprocal on the EUP slot.
            m = jnp.max(s, axis=-1, keepdims=True)
            e = jnp.exp(s - m)
            r = pl.reciprocal(jnp.sum(e, axis=-1, keepdims=True), approx=True)
            attn = e * r                                              # (S, S) f32

            attn_ref[bb, h] = attn.astype(attn_ref.dtype)

            ctx = jnp.dot(attn.astype(matmul_dtype), v.astype(matmul_dtype),
                          preferred_element_type=jnp.float32)         # (S, d_v)
            # Accumulate the output projection per head (no concat needed).
            proj = proj + jnp.dot(ctx.astype(matmul_dtype), wo_ref[h],
                                  preferred_element_type=jnp.float32)

        # Residual + LayerNorm(d_v) in f32.
        y = x + proj + bo_ref[...]
        mu = jnp.mean(y, axis=-1, keepdims=True)
        var = jnp.mean(jnp.square(y - mu), axis=-1, keepdims=True)
        normed = (y - mu) * jax.lax.rsqrt(var + 1e-5)
        out_ref[bb] = (normed * gamma_ref[...] + beta_ref[...]).astype(out_ref.dtype)


def multi_head_attention(x, attn_mask, params, *, d_k, d_v, n_heads,
                         matmul_dtype=jnp.float32, batch_block=1):
    B, S, d_model = x.shape
    assert d_model == d_v, "residual + LayerNorm(d_v) requires d_model == d_v"
    assert B % batch_block == 0

    # --- layout plumbing (outside the kernel, done once per call) ----------
    # Per-head, lane-dense weight slabs; MXU operands optionally in bf16.
    wq = params["wq"].reshape(d_model, n_heads, d_k).transpose(1, 0, 2).astype(matmul_dtype)
    wk = params["wk"].reshape(d_model, n_heads, d_k).transpose(1, 0, 2).astype(matmul_dtype)
    wv = params["wv"].reshape(d_model, n_heads, d_v).transpose(1, 0, 2).astype(matmul_dtype)
    wo = params["wo"].reshape(n_heads, d_v, d_v).astype(matmul_dtype)
    bq = params["bq"].reshape(1, n_heads, d_k).transpose(1, 0, 2)      # (H,1,d_k) f32
    bk = params["bk"].reshape(1, n_heads, d_k).transpose(1, 0, 2)
    bv = params["bv"].reshape(1, n_heads, d_v).transpose(1, 0, 2)
    mask8 = (attn_mask != 0).astype(jnp.int8)          # 4x less mask DMA than int32

    kernel = functools.partial(
        _mha_kernel, batch_block=batch_block, d_k=d_k, d_v=d_v,
        n_heads=n_heads, matmul_dtype=matmul_dtype)

    full = lambda shape: pl.BlockSpec(shape, lambda b, _s=shape: (0,) * len(_s))

    out_shape = (
        jax.ShapeDtypeStruct((B, S, d_v), jnp.float32),          # output
        jax.ShapeDtypeStruct((B, n_heads, S, S), jnp.float32),   # attn
    )

    grid_spec = pltpu.PrefetchScalarGridSpec(
        num_scalar_prefetch=0,
        grid=(B // batch_block,),
        in_specs=[
            pl.BlockSpec((batch_block, S, d_model), lambda b: (b, 0, 0)),  # x
            pl.BlockSpec((batch_block, S, S), lambda b: (b, 0, 0)),        # mask (int8)
            full((n_heads, d_model, d_k)),                                 # W_Q
            full((n_heads, 1, d_k)),                                       # b_Q
            full((n_heads, d_model, d_k)),                                 # W_K
            full((n_heads, 1, d_k)),                                       # b_K
            full((n_heads, d_model, d_v)),                                 # W_V
            full((n_heads, 1, d_v)),                                       # b_V
            full((n_heads, d_v, d_v)),                                     # W_out
            full((1, d_v)),                                                # b_out
            full((1, d_v)),                                                # gamma
            full((1, d_v)),                                                # beta
        ],
        out_specs=[
            pl.BlockSpec((batch_block, S, d_v), lambda b: (b, 0, 0)),
            pl.BlockSpec((batch_block, n_heads, S, S), lambda b: (b, 0, 0, 0)),
        ],
    )

    fn = pl.pallas_call(
        kernel,
        out_shape=out_shape,
        grid_spec=grid_spec,
        compiler_params=pltpu.CompilerParams(
            dimension_semantics=("parallel",),
            vmem_limit_bytes=32 * 1024 * 1024),
    )
    return fn(x, mask8,
              wq, bq, wk, bk, wv, bv,
              wo, params["bo"], params["gamma"], params["beta"])


def _reference(x, attn_mask, params, *, d_k, d_v, n_heads):
    B, S, d_model = x.shape
    q = (x @ params["wq"] + params["bq"]).reshape(B, S, n_heads, d_k).transpose(0, 2, 1, 3)
    k = (x @ params["wk"] + params["bk"]).reshape(B, S, n_heads, d_k).transpose(0, 2, 1, 3)
    v = (x @ params["wv"] + params["bv"]).reshape(B, S, n_heads, d_v).transpose(0, 2, 1, 3)
    scores = jnp.einsum("bhqd,bhkd->bhqk", q, k) / np.sqrt(d_k)
    scores = jnp.where(attn_mask[:, None, :, :] != 0, -1e9, scores)
    attn = jax.nn.softmax(scores, axis=-1)
    ctx = jnp.einsum("bhqk,bhkd->bhqd", attn, v).transpose(0, 2, 1, 3).reshape(B, S, n_heads * d_v)
    out = ctx @ params["wo"] + params["bo"]
    y = x + out
    mu = jnp.mean(y, axis=-1, keepdims=True)
    var = jnp.mean(jnp.square(y - mu), axis=-1, keepdims=True)
    out = (y - mu) / jnp.sqrt(var + 1e-5) * params["gamma"] + params["beta"]
    return out, attn


if __name__ == "__main__":
    B, S = 2, 8
    d_model, d_k, d_v, n_heads = 32, 16, 32, 4   # d_model == d_v (required by residual+LN)

    key = jax.random.PRNGKey(0)
    keys = jax.random.split(key, 12)

    params = {
        "wq": jax.random.normal(keys[0], (d_model, n_heads * d_k), jnp.float32) * 0.1,
        "bq": jax.random.normal(keys[1], (1, n_heads * d_k), jnp.float32) * 0.1,
        "wk": jax.random.normal(keys[2], (d_model, n_heads * d_k), jnp.float32) * 0.1,
        "bk": jax.random.normal(keys[3], (1, n_heads * d_k), jnp.float32) * 0.1,
        "wv": jax.random.normal(keys[4], (d_model, n_heads * d_v), jnp.float32) * 0.1,
        "bv": jax.random.normal(keys[5], (1, n_heads * d_v), jnp.float32) * 0.1,
        "wo": jax.random.normal(keys[6], (n_heads * d_v, d_v), jnp.float32) * 0.1,
        "bo": jax.random.normal(keys[7], (1, d_v), jnp.float32) * 0.1,
        "gamma": jnp.ones((1, d_v), jnp.float32),
        "beta": jnp.zeros((1, d_v), jnp.float32),
    }

    x = jax.random.normal(keys[8], (B, S, d_model), jnp.float32)
    # Deterministic padding-style mask: batch 0 masks last 2 key positions,
    # batch 1 masks the last key position.
    key_valid = jnp.array([[1] * 6 + [0] * 2, [1] * 7 + [0]], dtype=jnp.int32)  # (B, S)
    attn_mask = (1 - key_valid)[:, None, :] * jnp.ones((1, S, 1), jnp.int32)    # (B, S, S)

    ref_out, ref_attn = _reference(x, attn_mask, params,
                                   d_k=d_k, d_v=d_v, n_heads=n_heads)

    # 1) f32 MXU operands: preserves the module's numerics (tight check).
    out, attn = multi_head_attention(x, attn_mask, params,
                                     d_k=d_k, d_v=d_v, n_heads=n_heads)
    jax.block_until_ready((out, attn))
    np.testing.assert_allclose(np.asarray(out), np.asarray(ref_out), atol=5e-3, rtol=5e-3)
    np.testing.assert_allclose(np.asarray(attn), np.asarray(ref_attn), atol=5e-3, rtol=5e-3)

    # 2) bf16 MXU operands (f32 accumulation / softmax / LayerNorm):
    #    2x MXU throughput and half the weight DMA; loose tolerance vs f32 ref.
    out16, attn16 = multi_head_attention(x, attn_mask, params,
                                         d_k=d_k, d_v=d_v, n_heads=n_heads,
                                         matmul_dtype=jnp.bfloat16)
    jax.block_until_ready((out16, attn16))
    np.testing.assert_allclose(np.asarray(out16), np.asarray(ref_out), atol=5e-2, rtol=5e-2)
    np.testing.assert_allclose(np.asarray(attn16), np.asarray(ref_attn), atol=2e-2, rtol=2e-2)

    print("KERNEL_OK")
</pallas_src>

<mosaic_0001>
module attributes {stable_mosaic.version = 11 : i64} {
  func.func @_mha_kernel(%arg0: i32, %arg1: memref<1x8x32xf32, #tpu.memory_space<vmem>>, %arg2: memref<1x8x8xi8, #tpu.memory_space<vmem>>, %arg3: memref<4x32x16xf32, #tpu.memory_space<vmem>>, %arg4: memref<4x1x16xf32, #tpu.memory_space<vmem>>, %arg5: memref<4x32x16xf32, #tpu.memory_space<vmem>>, %arg6: memref<4x1x16xf32, #tpu.memory_space<vmem>>, %arg7: memref<4x32x32xf32, #tpu.memory_space<vmem>>, %arg8: memref<4x1x32xf32, #tpu.memory_space<vmem>>, %arg9: memref<4x32x32xf32, #tpu.memory_space<vmem>>, %arg10: memref<1x32xf32, #tpu.memory_space<vmem>>, %arg11: memref<1x32xf32, #tpu.memory_space<vmem>>, %arg12: memref<1x32xf32, #tpu.memory_space<vmem>>, %arg13: memref<1x8x32xf32, #tpu.memory_space<vmem>>, %arg14: memref<1x4x8x8xf32, #tpu.memory_space<vmem>>) attributes {dimension_semantics = [#tpu.dimension_semantics<parallel>], iteration_bounds = array<i64: 2>, scalar_prefetch = 0 : i64, scratch_operands = 0 : i64, tpu.core_type = #tpu.core_type<tc>, window_params = [{transform_indices = @transform_0, window_bounds = array<i64: 1, 8, 32>}, {transform_indices = @transform_1, window_bounds = array<i64: 1, 8, 8>}, {pipeline_mode = #tpu.pipeline_mode<synchronous>, transform_indices = @transform_2, window_bounds = array<i64: 4, 32, 16>}, {pipeline_mode = #tpu.pipeline_mode<synchronous>, transform_indices = @transform_3, window_bounds = array<i64: 4, 1, 16>}, {pipeline_mode = #tpu.pipeline_mode<synchronous>, transform_indices = @transform_4, window_bounds = array<i64: 4, 32, 16>}, {pipeline_mode = #tpu.pipeline_mode<synchronous>, transform_indices = @transform_5, window_bounds = array<i64: 4, 1, 16>}, {pipeline_mode = #tpu.pipeline_mode<synchronous>, transform_indices = @transform_6, window_bounds = array<i64: 4, 32, 32>}, {pipeline_mode = #tpu.pipeline_mode<synchronous>, transform_indices = @transform_7, window_bounds = array<i64: 4, 1, 32>}, {pipeline_mode = #tpu.pipeline_mode<synchronous>, transform_indices = @transform_8, window_bounds = array<i64: 4, 32, 32>}, {pipeline_mode = #tpu.pipeline_mode<synchronous>, transform_indices = @transform_9, window_bounds = array<i64: 1, 32>}, {pipeline_mode = #tpu.pipeline_mode<synchronous>, transform_indices = @transform_10, window_bounds = array<i64: 1, 32>}, {pipeline_mode = #tpu.pipeline_mode<synchronous>, transform_indices = @transform_11, window_bounds = array<i64: 1, 32>}, {transform_indices = @transform_12, window_bounds = array<i64: 1, 8, 32>}, {transform_indices = @transform_13, window_bounds = array<i64: 1, 4, 8, 8>}]} {
    %c0 = arith.constant 0 : index
    %c0_0 = arith.constant 0 : index
    %c0_1 = arith.constant 0 : index
    %0 = vector.load %arg1[%c0, %c0_0, %c0_1] : memref<1x8x32xf32, #tpu.memory_space<vmem>>, vector<1x8x32xf32>
    %1 = vector.shape_cast %0 : vector<1x8x32xf32> to vector<8x32xf32>
    %c0_2 = arith.constant 0 : index
    %c0_3 = arith.constant 0 : index
    %c0_4 = arith.constant 0 : index
    %2 = vector.load %arg2[%c0_2, %c0_3, %c0_4] : memref<1x8x8xi8, #tpu.memory_space<vmem>>, vector<1x8x8xi8>
    %3 = vector.shape_cast %2 : vector<1x8x8xi8> to vector<8x8xi8>
    %c0_i8 = arith.constant 0 : i8
    %4 = vector.broadcast %c0_i8 : i8 to vector<8x8xi8>
    %5 = arith.cmpi ne, %3, %4 : vector<8x8xi8>
    %cst = arith.constant 0.000000e+00 : f32
    %6 = vector.broadcast %cst : f32 to vector<8x32xf32>
    %c0_5 = arith.constant 0 : index
    %c0_6 = arith.constant 0 : index
    %c0_7 = arith.constant 0 : index
    %7 = vector.load %arg3[%c0_5, %c0_6, %c0_7] : memref<4x32x16xf32, #tpu.memory_space<vmem>>, vector<1x32x16xf32>
    %8 = vector.shape_cast %7 : vector<1x32x16xf32> to vector<32x16xf32>
    %cst_8 = arith.constant dense<0.000000e+00> : vector<8x16xf32>
    %9 = tpu.matmul %1, %8, %cst_8 {dimension_numbers = #tpu.dot_dimension_numbers<[1], [0], [0], [1], [0, 0, 1, 1], [], []>} : vector<8x32xf32>, vector<32x16xf32>, vector<8x16xf32> -> vector<8x16xf32>
    %c0_9 = arith.constant 0 : index
    %c0_10 = arith.constant 0 : index
    %c0_11 = arith.constant 0 : index
    %10 = vector.load %arg4[%c0_9, %c0_10, %c0_11] : memref<4x1x16xf32, #tpu.memory_space<vmem>>, vector<1x1x16xf32>
    %11 = vector.shape_cast %10 : vector<1x1x16xf32> to vector<1x16xf32>
    %12 = vector.broadcast %11 : vector<1x16xf32> to vector<8x16xf32>
    %13 = arith.addf %9, %12 : vector<8x16xf32>
    %c0_12 = arith.constant 0 : index
    %c0_13 = arith.constant 0 : index
    %c0_14 = arith.constant 0 : index
    %14 = vector.load %arg5[%c0_12, %c0_13, %c0_14] : memref<4x32x16xf32, #tpu.memory_space<vmem>>, vector<1x32x16xf32>
    %15 = vector.shape_cast %14 : vector<1x32x16xf32> to vector<32x16xf32>
    %cst_15 = arith.constant dense<0.000000e+00> : vector<8x16xf32>
    %16 = tpu.matmul %1, %15, %cst_15 {dimension_numbers = #tpu.dot_dimension_numbers<[1], [0], [0], [1], [0, 0, 1, 1], [], []>} : vector<8x32xf32>, vector<32x16xf32>, vector<8x16xf32> -> vector<8x16xf32>
    %c0_16 = arith.constant 0 : index
    %c0_17 = arith.constant 0 : index
    %c0_18 = arith.constant 0 : index
    %17 = vector.load %arg6[%c0_16, %c0_17, %c0_18] : memref<4x1x16xf32, #tpu.memory_space<vmem>>, vector<1x1x16xf32>
    %18 = vector.shape_cast %17 : vector<1x1x16xf32> to vector<1x16xf32>
    %19 = vector.broadcast %18 : vector<1x16xf32> to vector<8x16xf32>
    %20 = arith.addf %16, %19 : vector<8x16xf32>
    %c0_19 = arith.constant 0 : index
    %c0_20 = arith.constant 0 : index
    %c0_21 = arith.constant 0 : index
    %21 = vector.load %arg7[%c0_19, %c0_20, %c0_21] : memref<4x32x32xf32, #tpu.memory_space<vmem>>, vector<1x32x32xf32>
    %22 = vector.shape_cast %21 : vector<1x32x32xf32> to vector<32x32xf32>
    %cst_22 = arith.constant dense<0.000000e+00> : vector<8x32xf32>
    %23 = tpu.matmul %1, %22, %cst_22 {dimension_numbers = #tpu.dot_dimension_numbers<[1], [0], [0], [1], [0, 0, 1, 1], [], []>} : vector<8x32xf32>, vector<32x32xf32>, vector<8x32xf32> -> vector<8x32xf32>
    %c0_23 = arith.constant 0 : index
    %c0_24 = arith.constant 0 : index
    %c0_25 = arith.constant 0 : index
    %24 = vector.load %arg8[%c0_23, %c0_24, %c0_25] : memref<4x1x32xf32, #tpu.memory_space<vmem>>, vector<1x1x32xf32>
    %25 = vector.shape_cast %24 : vector<1x1x32xf32> to vector<1x32xf32>
    %26 = vector.broadcast %25 : vector<1x32xf32> to vector<8x32xf32>
    %27 = arith.addf %23, %26 : vector<8x32xf32>
    %cst_26 = arith.constant 2.500000e-01 : f32
    %28 = vector.broadcast %cst_26 : f32 to vector<8x16xf32>
    %29 = arith.mulf %13, %28 : vector<8x16xf32>
    %30 = tpu.transpose %20, [1, 0] : vector<8x16xf32> -> vector<16x8xf32>
    %cst_27 = arith.constant dense<0.000000e+00> : vector<8x8xf32>
    %31 = tpu.matmul %29, %30, %cst_27 {dimension_numbers = #tpu.dot_dimension_numbers<[1], [0], [0], [1], [0, 0, 1, 1], [], []>} : vector<8x16xf32>, vector<16x8xf32>, vector<8x8xf32> -> vector<8x8xf32>
    %cst_28 = arith.constant -1.000000e+09 : f32
    %32 = vector.broadcast %cst_28 : f32 to vector<8x8xf32>
    %33 = arith.select %5, %32, %31 : vector<8x8xi1>, vector<8x8xf32>
    %cst_29 = arith.constant dense<0xFF800000> : vector<8xf32>
    %34 = vector.multi_reduction <maximumf>, %33, %cst_29 [1] : vector<8x8xf32> to vector<8xf32>
    %35 = vector.shape_cast %34 : vector<8xf32> to vector<8x1xf32>
    %36 = vector.broadcast %35 : vector<8x1xf32> to vector<8x8xf32>
    %37 = arith.subf %33, %36 : vector<8x8xf32>
    %38 = math.exp %37 : vector<8x8xf32>
    %cst_30 = arith.constant dense<0.000000e+00> : vector<8xf32>
    %39 = vector.multi_reduction <add>, %38, %cst_30 [1] : vector<8x8xf32> to vector<8xf32>
    %40 = vector.shape_cast %39 : vector<8xf32> to vector<8x1xf32>
    %41 = tpu.reciprocal %40 {approx = true} : vector<8x1xf32> -> vector<8x1xf32>
    %42 = vector.broadcast %41 : vector<8x1xf32> to vector<8x8xf32>
    %43 = arith.mulf %38, %42 : vector<8x8xf32>
    %c0_31 = arith.constant 0 : index
    %c0_32 = arith.constant 0 : index
    %c0_33 = arith.constant 0 : index
    %c0_34 = arith.constant 0 : index
    %44 = vector.load %arg14[%c0_31, %c0_32, %c0_33, %c0_34] : memref<1x4x8x8xf32, #tpu.memory_space<vmem>>, vector<1x1x8x8xf32>
    %45 = vector.shape_cast %44 : vector<1x1x8x8xf32> to vector<8x8xf32>
    %46 = vector.shape_cast %43 : vector<8x8xf32> to vector<1x1x8x8xf32>
    tpu.vector_store %arg14[%c0_31, %c0_32, %c0_33, %c0_34], %46 {strides = array<i32>} : memref<1x4x8x8xf32, #tpu.memory_space<vmem>>, vector<1x1x8x8xf32>,
    %cst_35 = arith.constant dense<0.000000e+00> : vector<8x32xf32>
    %47 = tpu.matmul %43, %27, %cst_35 {dimension_numbers = #tpu.dot_dimension_numbers<[1], [0], [0], [1], [0, 0, 1, 1], [], []>} : vector<8x8xf32>, vector<8x32xf32>, vector<8x32xf32> -> vector<8x32xf32>
    %c0_36 = arith.constant 0 : index
    %c0_37 = arith.constant 0 : index
    %c0_38 = arith.constant 0 : index
    %48 = vector.load %arg9[%c0_36, %c0_37, %c0_38] : memref<4x32x32xf32, #tpu.memory_space<vmem>>, vector<1x32x32xf32>
    %49 = vector.shape_cast %48 : vector<1x32x32xf32> to vector<32x32xf32>
    %cst_39 = arith.constant dense<0.000000e+00> : vector<8x32xf32>
    %50 = tpu.matmul %47, %49, %cst_39 {dimension_numbers = #tpu.dot_dimension_numbers<[1], [0], [0], [1], [0, 0, 1, 1], [], []>} : vector<8x32xf32>, vector<32x32xf32>, vector<8x32xf32> -> vector<8x32xf32>
    %51 = arith.addf %6, %50 : vector<8x32xf32>
    %c1 = arith.constant 1 : index
    %c0_40 = arith.constant 0 : index
    %c0_41 = arith.constant 0 : index
    %52 = vector.load %arg3[%c1, %c0_40, %c0_41] : memref<4x32x16xf32, #tpu.memory_space<vmem>>, vector<1x32x16xf32>
    %53 = vector.shape_cast %52 : vector<1x32x16xf32> to vector<32x16xf32>
    %cst_42 = arith.constant dense<0.000000e+00> : vector<8x16xf32>
    %54 = tpu.matmul %1, %53, %cst_42 {dimension_numbers = #tpu.dot_dimension_numbers<[1], [0], [0], [1], [0, 0, 1, 1], [], []>} : vector<8x32xf32>, vector<32x16xf32>, vector<8x16xf32> -> vector<8x16xf32>
    %c1_43 = arith.constant 1 : index
    %c0_44 = arith.constant 0 : index
    %c0_45 = arith.constant 0 : index
    %55 = vector.load %arg4[%c1_43, %c0_44, %c0_45] : memref<4x1x16xf32, #tpu.memory_space<vmem>>, vector<1x1x16xf32>
    %56 = vector.shape_cast %55 : vector<1x1x16xf32> to vector<1x16xf32>
    %57 = vector.broadcast %56 : vector<1x16xf32> to vector<8x16xf32>
    %58 = arith.addf %54, %57 : vector<8x16xf32>
    %c1_46 = arith.constant 1 : index
    %c0_47 = arith.constant 0 : index
    %c0_48 = arith.constant 0 : index
    %59 = vector.load %arg5[%c1_46, %c0_47, %c0_48] : memref<4x32x16xf32, #tpu.memory_space<vmem>>, vector<1x32x16xf32>
    %60 = vector.shape_cast %59 : vector<1x32x16xf32> to vector<32x16xf32>
    %cst_49 = arith.constant dense<0.000000e+00> : vector<8x16xf32>
    %61 = tpu.matmul %1, %60, %cst_49 {dimension_numbers = #tpu.dot_dimension_numbers<[1], [0], [0], [1], [0, 0, 1, 1], [], []>} : vector<8x32xf32>, vector<32x16xf32>, vector<8x16xf32> -> vector<8x16xf32>
    %c1_50 = arith.constant 1 : index
    %c0_51 = arith.constant 0 : index
    %c0_52 = arith.constant 0 : index
    %62 = vector.load %arg6[%c1_50, %c0_51, %c0_52] : memref<4x1x16xf32, #tpu.memory_space<vmem>>, vector<1x1x16xf32>
    %63 = vector.shape_cast %62 : vector<1x1x16xf32> to vector<1x16xf32>
    %64 = vector.broadcast %63 : vector<1x16xf32> to vector<8x16xf32>
    %65 = arith.addf %61, %64 : vector<8x16xf32>
    %c1_53 = arith.constant 1 : index
    %c0_54 = arith.constant 0 : index
    %c0_55 = arith.constant 0 : index
    %66 = vector.load %arg7[%c1_53, %c0_54, %c0_55] : memref<4x32x32xf32, #tpu.memory_space<vmem>>, vector<1x32x32xf32>
    %67 = vector.shape_cast %66 : vector<1x32x32xf32> to vector<32x32xf32>
    %cst_56 = arith.constant dense<0.000000e+00> : vector<8x32xf32>
    %68 = tpu.matmul %1, %67, %cst_56 {dimension_numbers = #tpu.dot_dimension_numbers<[1], [0], [0], [1], [0, 0, 1, 1], [], []>} : vector<8x32xf32>, vector<32x32xf32>, vector<8x32xf32> -> vector<8x32xf32>
    %c1_57 = arith.constant 1 : index
    %c0_58 = arith.constant 0 : index
    %c0_59 = arith.constant 0 : index
    %69 = vector.load %arg8[%c1_57, %c0_58, %c0_59] : memref<4x1x32xf32, #tpu.memory_space<vmem>>, vector<1x1x32xf32>
    %70 = vector.shape_cast %69 : vector<1x1x32xf32> to vector<1x32xf32>
    %71 = vector.broadcast %70 : vector<1x32xf32> to vector<8x32xf32>
    %72 = arith.addf %68, %71 : vector<8x32xf32>
    %cst_60 = arith.constant 2.500000e-01 : f32
    %73 = vector.broadcast %cst_60 : f32 to vector<8x16xf32>
    %74 = arith.mulf %58, %73 : vector<8x16xf32>
    %75 = tpu.transpose %65, [1, 0] : vector<8x16xf32> -> vector<16x8xf32>
    %cst_61 = arith.constant dense<0.000000e+00> : vector<8x8xf32>
    %76 = tpu.matmul %74, %75, %cst_61 {dimension_numbers = #tpu.dot_dimension_numbers<[1], [0], [0], [1], [0, 0, 1, 1], [], []>} : vector<8x16xf32>, vector<16x8xf32>, vector<8x8xf32> -> vector<8x8xf32>
    %cst_62 = arith.constant -1.000000e+09 : f32
    %77 = vector.broadcast %cst_62 : f32 to vector<8x8xf32>
    %78 = arith.select %5, %77, %76 : vector<8x8xi1>, vector<8x8xf32>
    %cst_63 = arith.constant dense<0xFF800000> : vector<8xf32>
    %79 = vector.multi_reduction <maximumf>, %78, %cst_63 [1] : vector<8x8xf32> to vector<8xf32>
    %80 = vector.shape_cast %79 : vector<8xf32> to vector<8x1xf32>
    %81 = vector.broadcast %80 : vector<8x1xf32> to vector<8x8xf32>
    %82 = arith.subf %78, %81 : vector<8x8xf32>
    %83 = math.exp %82 : vector<8x8xf32>
    %cst_64 = arith.constant dense<0.000000e+00> : vector<8xf32>
    %84 = vector.multi_reduction <add>, %83, %cst_64 [1] : vector<8x8xf32> to vector<8xf32>
    %85 = vector.shape_cast %84 : vector<8xf32> to vector<8x1xf32>
    %86 = tpu.reciprocal %85 {approx = true} : vector<8x1xf32> -> vector<8x1xf32>
    %87 = vector.broadcast %86 : vector<8x1xf32> to vector<8x8xf32>
    %88 = arith.mulf %83, %87 : vector<8x8xf32>
    %c0_65 = arith.constant 0 : index
    %c1_66 = arith.constant 1 : index
    %c0_67 = arith.constant 0 : index
    %c0_68 = arith.constant 0 : index
    %89 = vector.load %arg14[%c0_65, %c1_66, %c0_67, %c0_68] : memref<1x4x8x8xf32, #tpu.memory_space<vmem>>, vector<1x1x8x8xf32>
    %90 = vector.shape_cast %89 : vector<1x1x8x8xf32> to vector<8x8xf32>
    %91 = vector.shape_cast %88 : vector<8x8xf32> to vector<1x1x8x8xf32>
    tpu.vector_store %arg14[%c0_65, %c1_66, %c0_67, %c0_68], %91 {strides = array<i32>} : memref<1x4x8x8xf32, #tpu.memory_space<vmem>>, vector<1x1x8x8xf32>,
    %cst_69 = arith.constant dense<0.000000e+00> : vector<8x32xf32>
    %92 = tpu.matmul %88, %72, %cst_69 {dimension_numbers = #tpu.dot_dimension_numbers<[1], [0], [0], [1], [0, 0, 1, 1], [], []>} : vector<8x8xf32>, vector<8x32xf32>, vector<8x32xf32> -> vector<8x32xf32>
    %c1_70 = arith.constant 1 : index
    %c0_71 = arith.constant 0 : index
    %c0_72 = arith.constant 0 : index
    %93 = vector.load %arg9[%c1_70, %c0_71, %c0_72] : memref<4x32x32xf32, #tpu.memory_space<vmem>>, vector<1x32x32xf32>
    %94 = vector.shape_cast %93 : vector<1x32x32xf32> to vector<32x32xf32>
    %cst_73 = arith.constant dense<0.000000e+00> : vector<8x32xf32>
    %95 = tpu.matmul %92, %94, %cst_73 {dimension_numbers = #tpu.dot_dimension_numbers<[1], [0], [0], [1], [0, 0, 1, 1], [], []>} : vector<8x32xf32>, vector<32x32xf32>, vector<8x32xf32> -> vector<8x32xf32>
    %96 = arith.addf %51, %95 : vector<8x32xf32>
    %c2 = arith.constant 2 : index
    %c0_74 = arith.constant 0 : index
    %c0_75 = arith.constant 0 : index
    %97 = vector.load %arg3[%c2, %c0_74, %c0_75] : memref<4x32x16xf32, #tpu.memory_space<vmem>>, vector<1x32x16xf32>
    %98 = vector.shape_cast %97 : vector<1x32x16xf32> to vector<32x16xf32>
    %cst_76 = arith.constant dense<0.000000e+00> : vector<8x16xf32>
    %99 = tpu.matmul %1, %98, %cst_76 {dimension_numbers = #tpu.dot_dimension_numbers<[1], [0], [0], [1], [0, 0, 1, 1], [], []>} : vector<8x32xf32>, vector<32x16xf32>, vector<8x16xf32> -> vector<8x16xf32>
    %c2_77 = arith.constant 2 : index
    %c0_78 = arith.constant 0 : index
    %c0_79 = arith.constant 0 : index
    %100 = vector.load %arg4[%c2_77, %c0_78, %c0_79] : memref<4x1x16xf32, #tpu.memory_space<vmem>>, vector<1x1x16xf32>
    %101 = vector.shape_cast %100 : vector<1x1x16xf32> to vector<1x16xf32>
    %102 = vector.broadcast %101 : vector<1x16xf32> to vector<8x16xf32>
    %103 = arith.addf %99, %102 : vector<8x16xf32>
    %c2_80 = arith.constant 2 : index
    %c0_81 = arith.constant 0 : index
    %c0_82 = arith.constant 0 : index
    %104 = vector.load %arg5[%c2_80, %c0_81, %c0_82] : memref<4x32x16xf32, #tpu.memory_space<vmem>>, vector<1x32x16xf32>
    %105 = vector.shape_cast %104 : vector<1x32x16xf32> to vector<32x16xf32>
    %cst_83 = arith.constant dense<0.000000e+00> : vector<8x16xf32>
    %106 = tpu.matmul %1, %105, %cst_83 {dimension_numbers = #tpu.dot_dimension_numbers<[1], [0], [0], [1], [0, 0, 1, 1], [], []>} : vector<8x32xf32>, vector<32x16xf32>, vector<8x16xf32> -> vector<8x16xf32>
    %c2_84 = arith.constant 2 : index
    %c0_85 = arith.constant 0 : index
    %c0_86 = arith.constant 0 : index
    %107 = vector.load %arg6[%c2_84, %c0_85, %c0_86] : memref<4x1x16xf32, #tpu.memory_space<vmem>>, vector<1x1x16xf32>
    %108 = vector.shape_cast %107 : vector<1x1x16xf32> to vector<1x16xf32>
    %109 = vector.broadcast %108 : vector<1x16xf32> to vector<8x16xf32>
    %110 = arith.addf %106, %109 : vector<8x16xf32>
    %c2_87 = arith.constant 2 : index
    %c0_88 = arith.constant 0 : index
    %c0_89 = arith.constant 0 : index
    %111 = vector.load %arg7[%c2_87, %c0_88, %c0_89] : memref<4x32x32xf32, #tpu.memory_space<vmem>>, vector<1x32x32xf32>
    %112 = vector.shape_cast %111 : vector<1x32x32xf32> to vector<32x32xf32>
    %cst_90 = arith.constant dense<0.000000e+00> : vector<8x32xf32>
    %113 = tpu.matmul %1, %112, %cst_90 {dimension_numbers = #tpu.dot_dimension_numbers<[1], [0], [0], [1], [0, 0, 1, 1], [], []>} : vector<8x32xf32>, vector<32x32xf32>, vector<8x32xf32> -> vector<8x32xf32>
    %c2_91 = arith.constant 2 : index
    %c0_92 = arith.constant 0 : index
    %c0_93 = arith.constant 0 : index
    %114 = vector.load %arg8[%c2_91, %c0_92, %c0_93] : memref<4x1x32xf32, #tpu.memory_space<vmem>>, vector<1x1x32xf32>
    %115 = vector.shape_cast %114 : vector<1x1x32xf32> to vector<1x32xf32>
    %116 = vector.broadcast %115 : vector<1x32xf32> to vector<8x32xf32>
    %117 = arith.addf %113, %116 : vector<8x32xf32>
    %cst_94 = arith.constant 2.500000e-01 : f32
    %118 = vector.broadcast %cst_94 : f32 to vector<8x16xf32>
    %119 = arith.mulf %103, %118 : vector<8x16xf32>
    %120 = tpu.transpose %110, [1, 0] : vector<8x16xf32> -> vector<16x8xf32>
    %cst_95 = arith.constant dense<0.000000e+00> : vector<8x8xf32>
    %121 = tpu.matmul %119, %120, %cst_95 {dimension_numbers = #tpu.dot_dimension_numbers<[1], [0], [0], [1], [0, 0, 1, 1], [], []>} : vector<8x16xf32>, vector<16x8xf32>, vector<8x8xf32> -> vector<8x8xf32>
    %cst_96 = arith.constant -1.000000e+09 : f32
    %122 = vector.broadcast %cst_96 : f32 to vector<8x8xf32>
    %123 = arith.select %5, %122, %121 : vector<8x8xi1>, vector<8x8xf32>
    %cst_97 = arith.constant dense<0xFF800000> : vector<8xf32>
    %124 = vector.multi_reduction <maximumf>, %123, %cst_97 [1] : vector<8x8xf32> to vector<8xf32>
    %125 = vector.shape_cast %124 : vector<8xf32> to vector<8x1xf32>
    %126 = vector.broadcast %125 : vector<8x1xf32> to vector<8x8xf32>
    %127 = arith.subf %123, %126 : vector<8x8xf32>
    %128 = math.exp %127 : vector<8x8xf32>
    %cst_98 = arith.constant dense<0.000000e+00> : vector<8xf32>
    %129 = vector.multi_reduction <add>, %128, %cst_98 [1] : vector<8x8xf32> to vector<8xf32>
    %130 = vector.shape_cast %129 : vector<8xf32> to vector<8x1xf32>
    %131 = tpu.reciprocal %130 {approx = true} : vector<8x1xf32> -> vector<8x1xf32>
    %132 = vector.broadcast %131 : vector<8x1xf32> to vector<8x8xf32>
    %133 = arith.mulf %128, %132 : vector<8x8xf32>
    %c0_99 = arith.constant 0 : index
    %c2_100 = arith.constant 2 : index
    %c0_101 = arith.constant 0 : index
    %c0_102 = arith.constant 0 : index
    %134 = vector.load %arg14[%c0_99, %c2_100, %c0_101, %c0_102] : memref<1x4x8x8xf32, #tpu.memory_space<vmem>>, vector<1x1x8x8xf32>
    %135 = vector.shape_cast %134 : vector<1x1x8x8xf32> to vector<8x8xf32>
    %136 = vector.shape_cast %133 : vector<8x8xf32> to vector<1x1x8x8xf32>
    tpu.vector_store %arg14[%c0_99, %c2_100, %c0_101, %c0_102], %136 {strides = array<i32>} : memref<1x4x8x8xf32, #tpu.memory_space<vmem>>, vector<1x1x8x8xf32>,
    %cst_103 = arith.constant dense<0.000000e+00> : vector<8x32xf32>
    %137 = tpu.matmul %133, %117, %cst_103 {dimension_numbers = #tpu.dot_dimension_numbers<[1], [0], [0], [1], [0, 0, 1, 1], [], []>} : vector<8x8xf32>, vector<8x32xf32>, vector<8x32xf32> -> vector<8x32xf32>
    %c2_104 = arith.constant 2 : index
    %c0_105 = arith.constant 0 : index
    %c0_106 = arith.constant 0 : index
    %138 = vector.load %arg9[%c2_104, %c0_105, %c0_106] : memref<4x32x32xf32, #tpu.memory_space<vmem>>, vector<1x32x32xf32>
    %139 = vector.shape_cast %138 : vector<1x32x32xf32> to vector<32x32xf32>
    %cst_107 = arith.constant dense<0.000000e+00> : vector<8x32xf32>
    %140 = tpu.matmul %137, %139, %cst_107 {dimension_numbers = #tpu.dot_dimension_numbers<[1], [0], [0], [1], [0, 0, 1, 1], [], []>} : vector<8x32xf32>, vector<32x32xf32>, vector<8x32xf32> -> vector<8x32xf32>
    %141 = arith.addf %96, %140 : vector<8x32xf32>
    %c3 = arith.constant 3 : index
    %c0_108 = arith.constant 0 : index
    %c0_109 = arith.constant 0 : index
    %142 = vector.load %arg3[%c3, %c0_108, %c0_109] : memref<4x32x16xf32, #tpu.memory_space<vmem>>, vector<1x32x16xf32>
    %143 = vector.shape_cast %142 : vector<1x32x16xf32> to vector<32x16xf32>
    %cst_110 = arith.constant dense<0.000000e+00> : vector<8x16xf32>
    %144 = tpu.matmul %1, %143, %cst_110 {dimension_numbers = #tpu.dot_dimension_numbers<[1], [0], [0], [1], [0, 0, 1, 1], [], []>} : vector<8x32xf32>, vector<32x16xf32>, vector<8x16xf32> -> vector<8x16xf32>
    %c3_111 = arith.constant 3 : index
    %c0_112 = arith.constant 0 : index
    %c0_113 = arith.constant 0 : index
    %145 = vector.load %arg4[%c3_111, %c0_112, %c0_113] : memref<4x1x16xf32, #tpu.memory_space<vmem>>, vector<1x1x16xf32>
    %146 = vector.shape_cast %145 : vector<1x1x16xf32> to vector<1x16xf32>
    %147 = vector.broadcast %146 : vector<1x16xf32> to vector<8x16xf32>
    %148 = arith.addf %144, %147 : vector<8x16xf32>
    %c3_114 = arith.constant 3 : index
    %c0_115 = arith.constant 0 : index
    %c0_116 = arith.constant 0 : index
    %149 = vector.load %arg5[%c3_114, %c0_115, %c0_116] : memref<4x32x16xf32, #tpu.memory_space<vmem>>, vector<1x32x16xf32>
    %150 = vector.shape_cast %149 : vector<1x32x16xf32> to vector<32x16xf32>
    %cst_117 = arith.constant dense<0.000000e+00> : vector<8x16xf32>
    %151 = tpu.matmul %1, %150, %cst_117 {dimension_numbers = #tpu.dot_dimension_numbers<[1], [0], [0], [1], [0, 0, 1, 1], [], []>} : vector<8x32xf32>, vector<32x16xf32>, vector<8x16xf32> -> vector<8x16xf32>
    %c3_118 = arith.constant 3 : index
    %c0_119 = arith.constant 0 : index
    %c0_120 = arith.constant 0 : index
    %152 = vector.load %arg6[%c3_118, %c0_119, %c0_120] : memref<4x1x16xf32, #tpu.memory_space<vmem>>, vector<1x1x16xf32>
    %153 = vector.shape_cast %152 : vector<1x1x16xf32> to vector<1x16xf32>
    %154 = vector.broadcast %153 : vector<1x16xf32> to vector<8x16xf32>
    %155 = arith.addf %151, %154 : vector<8x16xf32>
    %c3_121 = arith.constant 3 : index
    %c0_122 = arith.constant 0 : index
    %c0_123 = arith.constant 0 : index
    %156 = vector.load %arg7[%c3_121, %c0_122, %c0_123] : memref<4x32x32xf32, #tpu.memory_space<vmem>>, vector<1x32x32xf32>
    %157 = vector.shape_cast %156 : vector<1x32x32xf32> to vector<32x32xf32>
    %cst_124 = arith.constant dense<0.000000e+00> : vector<8x32xf32>
    %158 = tpu.matmul %1, %157, %cst_124 {dimension_numbers = #tpu.dot_dimension_numbers<[1], [0], [0], [1], [0, 0, 1, 1], [], []>} : vector<8x32xf32>, vector<32x32xf32>, vector<8x32xf32> -> vector<8x32xf32>
    %c3_125 = arith.constant 3 : index
    %c0_126 = arith.constant 0 : index
    %c0_127 = arith.constant 0 : index
    %159 = vector.load %arg8[%c3_125, %c0_126, %c0_127] : memref<4x1x32xf32, #tpu.memory_space<vmem>>, vector<1x1x32xf32>
    %160 = vector.shape_cast %159 : vector<1x1x32xf32> to vector<1x32xf32>
    %161 = vector.broadcast %160 : vector<1x32xf32> to vector<8x32xf32>
    %162 = arith.addf %158, %161 : vector<8x32xf32>
    %cst_128 = arith.constant 2.500000e-01 : f32
    %163 = vector.broadcast %cst_128 : f32 to vector<8x16xf32>
    %164 = arith.mulf %148, %163 : vector<8x16xf32>
    %165 = tpu.transpose %155, [1, 0] : vector<8x16xf32> -> vector<16x8xf32>
    %cst_129 = arith.constant dense<0.000000e+00> : vector<8x8xf32>
    %166 = tpu.matmul %164, %165, %cst_129 {dimension_numbers = #tpu.dot_dimension_numbers<[1], [0], [0], [1], [0, 0, 1, 1], [], []>} : vector<8x16xf32>, vector<16x8xf32>, vector<8x8xf32> -> vector<8x8xf32>
    %cst_130 = arith.constant -1.000000e+09 : f32
    %167 = vector.broadcast %cst_130 : f32 to vector<8x8xf32>
    %168 = arith.select %5, %167, %166 : vector<8x8xi1>, vector<8x8xf32>
    %cst_131 = arith.constant dense<0xFF800000> : vector<8xf32>
    %169 = vector.multi_reduction <maximumf>, %168, %cst_131 [1] : vector<8x8xf32> to vector<8xf32>
    %170 = vector.shape_cast %169 : vector<8xf32> to vector<8x1xf32>
    %171 = vector.broadcast %170 : vector<8x1xf32> to vector<8x8xf32>
    %172 = arith.subf %168, %171 : vector<8x8xf32>
    %173 = math.exp %172 : vector<8x8xf32>
    %cst_132 = arith.constant dense<0.000000e+00> : vector<8xf32>
    %174 = vector.multi_reduction <add>, %173, %cst_132 [1] : vector<8x8xf32> to vector<8xf32>
    %175 = vector.shape_cast %174 : vector<8xf32> to vector<8x1xf32>
    %176 = tpu.reciprocal %175 {approx = true} : vector<8x1xf32> -> vector<8x1xf32>
    %177 = vector.broadcast %176 : vector<8x1xf32> to vector<8x8xf32>
    %178 = arith.mulf %173, %177 : vector<8x8xf32>
    %c0_133 = arith.constant 0 : index
    %c3_134 = arith.constant 3 : index
    %c0_135 = arith.constant 0 : index
    %c0_136 = arith.constant 0 : index
    %179 = vector.load %arg14[%c0_133, %c3_134, %c0_135, %c0_136] : memref<1x4x8x8xf32, #tpu.memory_space<vmem>>, vector<1x1x8x8xf32>
    %180 = vector.shape_cast %179 : vector<1x1x8x8xf32> to vector<8x8xf32>
    %181 = vector.shape_cast %178 : vector<8x8xf32> to vector<1x1x8x8xf32>
    tpu.vector_store %arg14[%c0_133, %c3_134, %c0_135, %c0_136], %181 {strides = array<i32>} : memref<1x4x8x8xf32, #tpu.memory_space<vmem>>, vector<1x1x8x8xf32>,
    %cst_137 = arith.constant dense<0.000000e+00> : vector<8x32xf32>
    %182 = tpu.matmul %178, %162, %cst_137 {dimension_numbers = #tpu.dot_dimension_numbers<[1], [0], [0], [1], [0, 0, 1, 1], [], []>} : vector<8x8xf32>, vector<8x32xf32>, vector<8x32xf32> -> vector<8x32xf32>
    %c3_138 = arith.constant 3 : index
    %c0_139 = arith.constant 0 : index
    %c0_140 = arith.constant 0 : index
    %183 = vector.load %arg9[%c3_138, %c0_139, %c0_140] : memref<4x32x32xf32, #tpu.memory_space<vmem>>, vector<1x32x32xf32>
    %184 = vector.shape_cast %183 : vector<1x32x32xf32> to vector<32x32xf32>
    %cst_141 = arith.constant dense<0.000000e+00> : vector<8x32xf32>
    %185 = tpu.matmul %182, %184, %cst_141 {dimension_numbers = #tpu.dot_dimension_numbers<[1], [0], [0], [1], [0, 0, 1, 1], [], []>} : vector<8x32xf32>, vector<32x32xf32>, vector<8x32xf32> -> vector<8x32xf32>
    %186 = arith.addf %141, %185 : vector<8x32xf32>
    %187 = arith.addf %1, %186 : vector<8x32xf32>
    %c0_142 = arith.constant 0 : index
    %c0_143 = arith.constant 0 : index
    %188 = vector.load %arg10[%c0_142, %c0_143] : memref<1x32xf32, #tpu.memory_space<vmem>>, vector<1x32xf32>
    %189 = vector.broadcast %188 : vector<1x32xf32> to vector<8x32xf32>
    %190 = arith.addf %187, %189 : vector<8x32xf32>
    %cst_144 = arith.constant dense<0.000000e+00> : vector<8xf32>
    %191 = vector.multi_reduction <add>, %190, %cst_144 [1] : vector<8x32xf32> to vector<8xf32>
    %192 = vector.shape_cast %191 : vector<8xf32> to vector<8x1xf32>
    %cst_145 = arith.constant 3.200000e+01 : f32
    %193 = vector.broadcast %cst_145 : f32 to vector<8x1xf32>
    %194 = arith.divf %192, %193 : vector<8x1xf32>
    %195 = vector.broadcast %194 : vector<8x1xf32> to vector<8x32xf32>
    %196 = arith.subf %190, %195 : vector<8x32xf32>
    %197 = arith.mulf %196, %196 : vector<8x32xf32>
    %cst_146 = arith.constant dense<0.000000e+00> : vector<8xf32>
    %198 = vector.multi_reduction <add>, %197, %cst_146 [1] : vector<8x32xf32> to vector<8xf32>
    %199 = vector.shape_cast %198 : vector<8xf32> to vector<8x1xf32>
    %cst_147 = arith.constant 3.200000e+01 : f32
    %200 = vector.broadcast %cst_147 : f32 to vector<8x1xf32>
    %201 = arith.divf %199, %200 : vector<8x1xf32>
    %202 = vector.broadcast %194 : vector<8x1xf32> to vector<8x32xf32>
    %203 = arith.subf %190, %202 : vector<8x32xf32>
    %cst_148 = arith.constant 9.99999974E-6 : f32
    %204 = vector.broadcast %cst_148 : f32 to vector<8x1xf32>
    %205 = arith.addf %201, %204 : vector<8x1xf32>
    %206 = math.rsqrt %205 : vector<8x1xf32>
    %207 = vector.broadcast %206 : vector<8x1xf32> to vector<8x32xf32>
    %208 = arith.mulf %203, %207 : vector<8x32xf32>
    %c0_149 = arith.constant 0 : index
    %c0_150 = arith.constant 0 : index
    %209 = vector.load %arg11[%c0_149, %c0_150] : memref<1x32xf32, #tpu.memory_space<vmem>>, vector<1x32xf32>
    %210 = vector.broadcast %209 : vector<1x32xf32> to vector<8x32xf32>
    %211 = arith.mulf %208, %210 : vector<8x32xf32>
    %c0_151 = arith.constant 0 : index
    %c0_152 = arith.constant 0 : index
    %212 = vector.load %arg12[%c0_151, %c0_152] : memref<1x32xf32, #tpu.memory_space<vmem>>, vector<1x32xf32>
    %213 = vector.broadcast %212 : vector<1x32xf32> to vector<8x32xf32>
    %214 = arith.addf %211, %213 : vector<8x32xf32>
    %c0_153 = arith.constant 0 : index
    %c0_154 = arith.constant 0 : index
    %c0_155 = arith.constant 0 : index
    %215 = vector.load %arg13[%c0_153, %c0_154, %c0_155] : memref<1x8x32xf32, #tpu.memory_space<vmem>>, vector<1x8x32xf32>
    %216 = vector.shape_cast %215 : vector<1x8x32xf32> to vector<8x32xf32>
    %217 = vector.shape_cast %214 : vector<8x32xf32> to vector<1x8x32xf32>
    tpu.vector_store %arg13[%c0_153, %c0_154, %c0_155], %217 {strides = array<i32>} : memref<1x8x32xf32, #tpu.memory_space<vmem>>, vector<1x8x32xf32>,
    return
  }
  func.func @transform_0(%arg0: i32) -> (i32, i32, i32) {
    %c0_i32 = arith.constant 0 : i32
    %c0_i32_0 = arith.constant 0 : i32
    %c0_i32_1 = arith.constant 0 : i32
    return %arg0, %c0_i32, %c0_i32_0 : i32, i32, i32
  }
  func.func @transform_1(%arg0: i32) -> (i32, i32, i32) {
    %c0_i32 = arith.constant 0 : i32
    %c0_i32_0 = arith.constant 0 : i32
    %c0_i32_1 = arith.constant 0 : i32
    return %arg0, %c0_i32, %c0_i32_0 : i32, i32, i32
  }
  func.func @transform_2(%arg0: i32) -> (i32, i32, i32) {
    %c0_i32 = arith.constant 0 : i32
    %c0_i32_0 = arith.constant 0 : i32
    %c0_i32_1 = arith.constant 0 : i32
    %c0_i32_2 = arith.constant 0 : i32
    return %c0_i32, %c0_i32_0, %c0_i32_1 : i32, i32, i32
  }
  func.func @transform_3(%arg0: i32) -> (i32, i32, i32) {
    %c0_i32 = arith.constant 0 : i32
    %c0_i32_0 = arith.constant 0 : i32
    %c0_i32_1 = arith.constant 0 : i32
    %c0_i32_2 = arith.constant 0 : i32
    return %c0_i32, %c0_i32_0, %c0_i32_1 : i32, i32, i32
  }
  func.func @transform_4(%arg0: i32) -> (i32, i32, i32) {
    %c0_i32 = arith.constant 0 : i32
    %c0_i32_0 = arith.constant 0 : i32
    %c0_i32_1 = arith.constant 0 : i32
    %c0_i32_2 = arith.constant 0 : i32
    return %c0_i32, %c0_i32_0, %c0_i32_1 : i32, i32, i32
  }
  func.func @transform_5(%arg0: i32) -> (i32, i32, i32) {
    %c0_i32 = arith.constant 0 : i32
    %c0_i32_0 = arith.constant 0 : i32
    %c0_i32_1 = arith.constant 0 : i32
    %c0_i32_2 = arith.constant 0 : i32
    return %c0_i32, %c0_i32_0, %c0_i32_1 : i32, i32, i32
  }
  func.func @transform_6(%arg0: i32) -> (i32, i32, i32) {
    %c0_i32 = arith.constant 0 : i32
    %c0_i32_0 = arith.constant 0 : i32
    %c0_i32_1 = arith.constant 0 : i32
    %c0_i32_2 = arith.constant 0 : i32
    return %c0_i32, %c0_i32_0, %c0_i32_1 : i32, i32, i32
  }
  func.func @transform_7(%arg0: i32) -> (i32, i32, i32) {
    %c0_i32 = arith.constant 0 : i32
    %c0_i32_0 = arith.constant 0 : i32
    %c0_i32_1 = arith.constant 0 : i32
    %c0_i32_2 = arith.constant 0 : i32
    return %c0_i32, %c0_i32_0, %c0_i32_1 : i32, i32, i32
  }
  func.func @transform_8(%arg0: i32) -> (i32, i32, i32) {
    %c0_i32 = arith.constant 0 : i32
    %c0_i32_0 = arith.constant 0 : i32
    %c0_i32_1 = arith.constant 0 : i32
    %c0_i32_2 = arith.constant 0 : i32
    return %c0_i32, %c0_i32_0, %c0_i32_1 : i32, i32, i32
  }
  func.func @transform_9(%arg0: i32) -> (i32, i32) {
    %c0_i32 = arith.constant 0 : i32
    %c0_i32_0 = arith.constant 0 : i32
    %c0_i32_1 = arith.constant 0 : i32
    return %c0_i32, %c0_i32_0 : i32, i32
  }
  func.func @transform_10(%arg0: i32) -> (i32, i32) {
    %c0_i32 = arith.constant 0 : i32
    %c0_i32_0 = arith.constant 0 : i32
    %c0_i32_1 = arith.constant 0 : i32
    return %c0_i32, %c0_i32_0 : i32, i32
  }
  func.func @transform_11(%arg0: i32) -> (i32, i32) {
    %c0_i32 = arith.constant 0 : i32
    %c0_i32_0 = arith.constant 0 : i32
    %c0_i32_1 = arith.constant 0 : i32
    return %c0_i32, %c0_i32_0 : i32, i32
  }
  func.func @transform_12(%arg0: i32) -> (i32, i32, i32) {
    %c0_i32 = arith.constant 0 : i32
    %c0_i32_0 = arith.constant 0 : i32
    %c0_i32_1 = arith.constant 0 : i32
    return %arg0, %c0_i32, %c0_i32_0 : i32, i32, i32
  }
  func.func @transform_13(%arg0: i32) -> (i32, i32, i32, i32) {
    %c0_i32 = arith.constant 0 : i32
    %c0_i32_0 = arith.constant 0 : i32
    %c0_i32_1 = arith.constant 0 : i32
    %c0_i32_2 = arith.constant 0 : i32
    return %arg0, %c0_i32, %c0_i32_0, %c0_i32_1 : i32, i32, i32, i32
  }
}

</mosaic_0001>

<llo_original>
// kernel: tpu_custom_call.1
$region0: #{tpu_custom_call.1}
  #allocation0 [shape = 'u32[]', space=smem, size = 0x4, offset = 0x4, fixed_abs, tag = 'smem constant byte address 0x4 - core index']
  #allocation1 [shape = 'u32[72,128]{1,0:T(1,128)}', space=vmem, size = 0x9000, scoped, tag = 'internal scratch']
  %s0 = inlined_call_operand.vmem [shape: f32[2,8,32], index: 0, kind: input, shape index: {}]
  %s1 = inlined_call_operand.vmem [shape: s8[2,8,8], index: 1, kind: input, shape index: {}]
  %s2 = inlined_call_operand.vmem [shape: f32[4,32,16], index: 2, kind: input, shape index: {}]
  %s3 = inlined_call_operand.vmem [shape: f32[4,1,16], index: 3, kind: input, shape index: {}]
  %s4 = inlined_call_operand.vmem [shape: f32[4,32,16], index: 4, kind: input, shape index: {}]
  %s5 = inlined_call_operand.vmem [shape: f32[4,1,16], index: 5, kind: input, shape index: {}]
  %s6 = inlined_call_operand.vmem [shape: f32[4,32,32], index: 6, kind: input, shape index: {}]
  %s7 = inlined_call_operand.vmem [shape: f32[4,1,32], index: 7, kind: input, shape index: {}]
  %s8 = inlined_call_operand.vmem [shape: f32[4,32,32], index: 8, kind: input, shape index: {}]
  %s9 = inlined_call_operand.vmem [shape: f32[1,32], index: 9, kind: input, shape index: {}]
  %s10 = inlined_call_operand.vmem [shape: f32[1,32], index: 10, kind: input, shape index: {}]
  %s11 = inlined_call_operand.vmem [shape: f32[1,32], index: 11, kind: input, shape index: {}]
  %s12 = inlined_call_operand.hbm [shape: f32[2,8,32], index: 12, kind: output, shape index: {0}]
  %s13 = inlined_call_operand.hbm [shape: f32[2,4,8,8], index: 13, kind: output, shape index: {1}]
  %14 = xla_tuple %s12, %s13
  %s15 = sld [smem:[#allocation0]]
  $region89: #{tpu_custom_call.1} parent=0
    _
  %s17 = ssub.s32 1, %s15
  %s18 = scalar_select 0, %s17, %s15
  $region1: #{tpu_custom_call.1} parent=0
    #allocation2 [shape = 'u8[8192]{0}', space=vmem, size = 0x2000, scoped, tag = 'output window, operand 0']
    #allocation3 [shape = 's32[2]{0}', space=sflag, size = 0x8, scoped, tag = 'scoped memory for tpu_custom_call.1']
    #allocation4 [shape = 'u8[32768]{0}', space=vmem, size = 0x8000, scoped, tag = 'output window, operand 1']
    #allocation5 [shape = 's32[2]{0}', space=sflag, size = 0x8, scoped, tag = 'scoped memory for tpu_custom_call.1']
    %19 = vsyncpa [#allocation3], 0
    %s20 = scalar_lea.sflag [#allocation3], 1
    %21 = vsyncpa %s20, 0
    %22 = vsyncpa [#allocation5], 0
    %s23 = scalar_lea.sflag [#allocation5], 1
    %24 = vsyncpa %s23, 0
    loop: start=0, step=1, limit=4
    $region2: #{tpu_custom_call.1} parent=1 // loop_pre_header
      _
    $region3: #{tpu_custom_call.1} parent=1 // loop_header
      %s26 = sphi 0, %s30
      %p27 = scmp.ge.s32.totalorder %s26, 4
      %s36 = sphi 0, %s38
      %s39 = sphi 0, %s36
      %s40 = sphi 0, %s39
      %s56 = sphi 0, %s40
      %s62 = sphi 0, %s64
      %s65 = sphi 0, %s62
      %s66 = sphi 0, %s65
      %s82 = sphi 0, %s66
      %s86 = sphi 0, %s86
      %s88 = sphi 0, %s86
      %s89 = sphi 0, %s88
      %s103 = sphi 0, %s89
      %s107 = sphi 0, %s107
      %s109 = sphi 0, %s107
      %s110 = sphi 0, %s109
      %s124 = sphi 0, %s110
      %s128 = sphi 0, %s128
      %s130 = sphi 0, %s128
      %s131 = sphi 0, %s130
      %s145 = sphi 0, %s131
      %s149 = sphi 0, %s149
      %s151 = sphi 0, %s149
      %s152 = sphi 0, %s151
      %s166 = sphi 0, %s152
      %s170 = sphi 0, %s170
      %s172 = sphi 0, %s170
      %s173 = sphi 0, %s172
      %s187 = sphi 0, %s173
      %s191 = sphi 0, %s191
      %s193 = sphi 0, %s191
      %s194 = sphi 0, %s193
      %s208 = sphi 0, %s194
      %s212 = sphi 0, %s212
      %s214 = sphi 0, %s212
      %s215 = sphi 0, %s214
      %s229 = sphi 0, %s215
      %s233 = sphi 0, %s233
      %s235 = sphi 0, %s233
      %s236 = sphi 0, %s235
      %s250 = sphi 0, %s236
      %s254 = sphi 0, %s254
      %s256 = sphi 0, %s254
      %s257 = sphi 0, %s256
      %s271 = sphi 0, %s257
      %s275 = sphi 0, %s275
      %s277 = sphi 0, %s275
      %s278 = sphi 0, %s277
      %s292 = sphi 0, %s278
      %s298 = sphi 0, %s300
      %s301 = sphi 0, %s298
      %s302 = sphi 0, %s301
      %s318 = sphi 0, %s302
      %s324 = sphi 0, %s326
      %s327 = sphi 0, %s324
      %s328 = sphi 0, %s327
      %s344 = sphi 0, %s328
    $region4: #{tpu_custom_call.1} parent=1 // loop_header_branch
      %29 = sbr.rel (%p27) target = $region8
    $region5: #{tpu_custom_call.1} parent=1 // loop_body
      %s31 = ssub.s32 %s26, 1
      %s32 = ssub.s32 %s26, 2
      %s33 = sadd.s32 %s26, 1
      %s34 = ssub.s32 %s26, %s33
      %p35 = scmp.eq.s32.totalorder %s34, 0
      %s37 = sadd.s32 %s36, 1
      %s38 = scalar_select %p35, %s36, %s37
      %p41 = pneg %p35
      %p42 = scmp.eq.s32.totalorder %s26, 1
      %p43 = por %p41, %p42
      %p44 = scmp.ne.s32.totalorder %s36, %s39
      %p45 = scmp.eq.s32.totalorder %s26, 0
      %p46 = por %p44, %p45
      %p47 = scmp.ne.s32.totalorder %s36, %s39
      %p48 = scmp.eq.s32.totalorder %s31, 1
      %p49 = por %p47, %p48
      %p50 = scmp.ne.s32.totalorder %s39, %s40
      %p51 = scmp.eq.s32.totalorder %s31, 0
      %p52 = por %p50, %p51
      %p53 = scmp.ne.s32.totalorder %s39, %s40
      %p54 = scmp.eq.s32.totalorder %s32, 1
      %p55 = por %p53, %p54
      %p57 = scmp.ne.s32.totalorder %s40, %s56
      %p58 = scmp.eq.s32.totalorder %s32, 0
      %p59 = por %p57, %p58
      %s60 = ssub.s32 %s26, %s33
      %p61 = scmp.eq.s32.totalorder %s60, 0
      %s63 = sadd.s32 %s62, 1
      %s64 = scalar_select %p61, %s62, %s63
      %p67 = pneg %p61
      %p68 = scmp.eq.s32.totalorder %s26, 1
      %p69 = por %p67, %p68
      %p70 = scmp.ne.s32.totalorder %s62, %s65
      %p71 = scmp.eq.s32.totalorder %s26, 0
      %p72 = por %p70, %p71
      %p73 = scmp.ne.s32.totalorder %s62, %s65
      %p74 = scmp.eq.s32.totalorder %s31, 1
      %p75 = por %p73, %p74
      %p76 = scmp.ne.s32.totalorder %s65, %s66
      %p77 = scmp.eq.s32.totalorder %s31, 0
      %p78 = por %p76, %p77
      %p79 = scmp.ne.s32.totalorder %s65, %s66
      %p80 = scmp.eq.s32.totalorder %s32, 1
      %p81 = por %p79, %p80
      %p83 = scmp.ne.s32.totalorder %s66, %s82
      %p84 = scmp.eq.s32.totalorder %s32, 0
      %p85 = por %p83, %p84
      %s87 = sadd.s32 %s86, 1
      %p90 = scmp.eq.s32.totalorder %s26, 1
      %p91 = scmp.ne.s32.totalorder %s86, %s88
      %p92 = scmp.eq.s32.totalorder %s26, 0
      %p93 = por %p91, %p92
      %p94 = scmp.ne.s32.totalorder %s86, %s88
      %p95 = scmp.eq.s32.totalorder %s31, 1
      %p96 = por %p94, %p95
      %p97 = scmp.ne.s32.totalorder %s88, %s89
      %p98 = scmp.eq.s32.totalorder %s31, 0
      %p99 = por %p97, %p98
      %p100 = scmp.ne.s32.totalorder %s88, %s89
      %p101 = scmp.eq.s32.totalorder %s32, 1
      %p102 = por %p100, %p101
      %p104 = scmp.ne.s32.totalorder %s89, %s103
      %p105 = scmp.eq.s32.totalorder %s32, 0
      %p106 = por %p104, %p105
      %s108 = sadd.s32 %s107, 1
      %p111 = scmp.eq.s32.totalorder %s26, 1
      %p112 = scmp.ne.s32.totalorder %s107, %s109
      %p113 = scmp.eq.s32.totalorder %s26, 0
      %p114 = por %p112, %p113
      %p115 = scmp.ne.s32.totalorder %s107, %s109
      %p116 = scmp.eq.s32.totalorder %s31, 1
      %p117 = por %p115, %p116
      %p118 = scmp.ne.s32.totalorder %s109, %s110
      %p119 = scmp.eq.s32.totalorder %s31, 0
      %p120 = por %p118, %p119
      %p121 = scmp.ne.s32.totalorder %s109, %s110
      %p122 = scmp.eq.s32.totalorder %s32, 1
      %p123 = por %p121, %p122
      %p125 = scmp.ne.s32.totalorder %s110, %s124
      %p126 = scmp.eq.s32.totalorder %s32, 0
      %p127 = por %p125, %p126
      %s129 = sadd.s32 %s128, 1
      %p132 = scmp.eq.s32.totalorder %s26, 1
      %p133 = scmp.ne.s32.totalorder %s128, %s130
      %p134 = scmp.eq.s32.totalorder %s26, 0
      %p135 = por %p133, %p134
      %p136 = scmp.ne.s32.totalorder %s128, %s130
      %p137 = scmp.eq.s32.totalorder %s31, 1
      %p138 = por %p136, %p137
      %p139 = scmp.ne.s32.totalorder %s130, %s131
      %p140 = scmp.eq.s32.totalorder %s31, 0
      %p141 = por %p139, %p140
      %p142 = scmp.ne.s32.totalorder %s130, %s131
      %p143 = scmp.eq.s32.totalorder %s32, 1
      %p144 = por %p142, %p143
      %p146 = scmp.ne.s32.totalorder %s131, %s145
      %p147 = scmp.eq.s32.totalorder %s32, 0
      %p148 = por %p146, %p147
      %s150 = sadd.s32 %s149, 1
      %p153 = scmp.eq.s32.totalorder %s26, 1
      %p154 = scmp.ne.s32.totalorder %s149, %s151
      %p155 = scmp.eq.s32.totalorder %s26, 0
      %p156 = por %p154, %p155
      %p157 = scmp.ne.s32.totalorder %s149, %s151
      %p158 = scmp.eq.s32.totalorder %s31, 1
      %p159 = por %p157, %p158
      %p160 = scmp.ne.s32.totalorder %s151, %s152
      %p161 = scmp.eq.s32.totalorder %s31, 0
      %p162 = por %p160, %p161
      %p163 = scmp.ne.s32.totalorder %s151, %s152
      %p164 = scmp.eq.s32.totalorder %s32, 1
      %p165 = por %p163, %p164
      %p167 = scmp.ne.s32.totalorder %s152, %s166
      %p168 = scmp.eq.s32.totalorder %s32, 0
      %p169 = por %p167, %p168
      %s171 = sadd.s32 %s170, 1
      %p174 = scmp.eq.s32.totalorder %s26, 1
      %p175 = scmp.ne.s32.totalorder %s170, %s172
      %p176 = scmp.eq.s32.totalorder %s26, 0
      %p177 = por %p175, %p176
      %p178 = scmp.ne.s32.totalorder %s170, %s172
      %p179 = scmp.eq.s32.totalorder %s31, 1
      %p180 = por %p178, %p179
      %p181 = scmp.ne.s32.totalorder %s172, %s173
      %p182 = scmp.eq.s32.totalorder %s31, 0
      %p183 = por %p181, %p182
      %p184 = scmp.ne.s32.totalorder %s172, %s173
      %p185 = scmp.eq.s32.totalorder %s32, 1
      %p186 = por %p184, %p185
      %p188 = scmp.ne.s32.totalorder %s173, %s187
      %p189 = scmp.eq.s32.totalorder %s32, 0
      %p190 = por %p188, %p189
      %s192 = sadd.s32 %s191, 1
      %p195 = scmp.eq.s32.totalorder %s26, 1
      %p196 = scmp.ne.s32.totalorder %s191, %s193
      %p197 = scmp.eq.s32.totalorder %s26, 0
      %p198 = por %p196, %p197
      %p199 = scmp.ne.s32.totalorder %s191, %s193
      %p200 = scmp.eq.s32.totalorder %s31, 1
      %p201 = por %p199, %p200
      %p202 = scmp.ne.s32.totalorder %s193, %s194
      %p203 = scmp.eq.s32.totalorder %s31, 0
      %p204 = por %p202, %p203
      %p205 = scmp.ne.s32.totalorder %s193, %s194
      %p206 = scmp.eq.s32.totalorder %s32, 1
      %p207 = por %p205, %p206
      %p209 = scmp.ne.s32.totalorder %s194, %s208
      %p210 = scmp.eq.s32.totalorder %s32, 0
      %p211 = por %p209, %p210
      %s213 = sadd.s32 %s212, 1
      %p216 = scmp.eq.s32.totalorder %s26, 1
      %p217 = scmp.ne.s32.totalorder %s212, %s214
      %p218 = scmp.eq.s32.totalorder %s26, 0
      %p219 = por %p217, %p218
      %p220 = scmp.ne.s32.totalorder %s212, %s214
      %p221 = scmp.eq.s32.totalorder %s31, 1
      %p222 = por %p220, %p221
      %p223 = scmp.ne.s32.totalorder %s214, %s215
      %p224 = scmp.eq.s32.totalorder %s31, 0
      %p225 = por %p223, %p224
      %p226 = scmp.ne.s32.totalorder %s214, %s215
      %p227 = scmp.eq.s32.totalorder %s32, 1
      %p228 = por %p226, %p227
      %p230 = scmp.ne.s32.totalorder %s215, %s229
      %p231 = scmp.eq.s32.totalorder %s32, 0
      %p232 = por %p230, %p231
      %s234 = sadd.s32 %s233, 1
      %p237 = scmp.eq.s32.totalorder %s26, 1
      %p238 = scmp.ne.s32.totalorder %s233, %s235
      %p239 = scmp.eq.s32.totalorder %s26, 0
      %p240 = por %p238, %p239
      %p241 = scmp.ne.s32.totalorder %s233, %s235
      %p242 = scmp.eq.s32.totalorder %s31, 1
      %p243 = por %p241, %p242
      %p244 = scmp.ne.s32.totalorder %s235, %s236
      %p245 = scmp.eq.s32.totalorder %s31, 0
      %p246 = por %p244, %p245
      %p247 = scmp.ne.s32.totalorder %s235, %s236
      %p248 = scmp.eq.s32.totalorder %s32, 1
      %p249 = por %p247, %p248
      %p251 = scmp.ne.s32.totalorder %s236, %s250
      %p252 = scmp.eq.s32.totalorder %s32, 0
      %p253 = por %p251, %p252
      %s255 = sadd.s32 %s254, 1
      %p258 = scmp.eq.s32.totalorder %s26, 1
      %p259 = scmp.ne.s32.totalorder %s254, %s256
      %p260 = scmp.eq.s32.totalorder %s26, 0
      %p261 = por %p259, %p260
      %p262 = scmp.ne.s32.totalorder %s254, %s256
      %p263 = scmp.eq.s32.totalorder %s31, 1
      %p264 = por %p262, %p263
      %p265 = scmp.ne.s32.totalorder %s256, %s257
      %p266 = scmp.eq.s32.totalorder %s31, 0
      %p267 = por %p265, %p266
      %p268 = scmp.ne.s32.totalorder %s256, %s257
      %p269 = scmp.eq.s32.totalorder %s32, 1
      %p270 = por %p268, %p269
      %p272 = scmp.ne.s32.totalorder %s257, %s271
      %p273 = scmp.eq.s32.totalorder %s32, 0
      %p274 = por %p272, %p273
      %s276 = sadd.s32 %s275, 1
      %p279 = scmp.eq.s32.totalorder %s26, 1
      %p280 = scmp.ne.s32.totalorder %s275, %s277
      %p281 = scmp.eq.s32.totalorder %s26, 0
      %p282 = por %p280, %p281
      %p283 = scmp.ne.s32.totalorder %s275, %s277
      %p284 = scmp.eq.s32.totalorder %s31, 1
      %p285 = por %p283, %p284
      %p286 = scmp.ne.s32.totalorder %s277, %s278
      %p287 = scmp.eq.s32.totalorder %s31, 0
      %p288 = por %p286, %p287
      %p289 = scmp.ne.s32.totalorder %s277, %s278
      %p290 = scmp.eq.s32.totalorder %s32, 1
      %p291 = por %p289, %p290
      %p293 = scmp.ne.s32.totalorder %s278, %s292
      %p294 = scmp.eq.s32.totalorder %s32, 0
      %p295 = por %p293, %p294
      %s296 = ssub.s32 %s26, %s33
      %p297 = scmp.eq.s32.totalorder %s296, 0
      %s299 = sadd.s32 %s298, 1
      %s300 = scalar_select %p297, %s298, %s299
      %p303 = pneg %p297
      %p304 = scmp.eq.s32.totalorder %s26, 1
      %p305 = por %p303, %p304
      %p306 = scmp.ne.s32.totalorder %s298, %s301
      %p307 = scmp.eq.s32.totalorder %s26, 0
      %p308 = por %p306, %p307
      %p309 = scmp.ne.s32.totalorder %s298, %s301
      %p310 = scmp.eq.s32.totalorder %s31, 1
      %p311 = por %p309, %p310
      %p312 = scmp.ne.s32.totalorder %s301, %s302
      %p313 = scmp.eq.s32.totalorder %s31, 0
      %p314 = por %p312, %p313
      %p315 = scmp.ne.s32.totalorder %s301, %s302
      %p316 = scmp.eq.s32.totalorder %s32, 1
      %p317 = por %p315, %p316
      %p319 = scmp.ne.s32.totalorder %s302, %s318
      %p320 = scmp.eq.s32.totalorder %s32, 0
      %p321 = por %p319, %p320
      %s322 = ssub.s32 %s26, %s33
      %p323 = scmp.eq.s32.totalorder %s322, 0
      %s325 = sadd.s32 %s324, 1
      %s326 = scalar_select %p323, %s324, %s325
      %p329 = pneg %p323
      %p330 = scmp.eq.s32.totalorder %s26, 1
      %p331 = por %p329, %p330
      %p332 = scmp.ne.s32.totalorder %s324, %s327
      %p333 = scmp.eq.s32.totalorder %s26, 0
      %p334 = por %p332, %p333
      %p335 = scmp.ne.s32.totalorder %s324, %s327
      %p336 = scmp.eq.s32.totalorder %s31, 1
      %p337 = por %p335, %p336
      %p338 = scmp.ne.s32.totalorder %s327, %s328
      %p339 = scmp.eq.s32.totalorder %s31, 0
      %p340 = por %p338, %p339
      %p341 = scmp.ne.s32.totalorder %s327, %s328
      %p342 = scmp.eq.s32.totalorder %s32, 1
      %p343 = por %p341, %p342
      %p345 = scmp.ne.s32.totalorder %s328, %s344
      %p346 = scmp.eq.s32.totalorder %s32, 0
      %p347 = por %p345, %p346
      %p348 = scmp.le.s32.totalorder 1, %s26
      %p349 = scmp.lt.s32.totalorder %s26, 3
      %p350 = pnand %p348, %p349
      %p351 = pneg %p350
      // Predicated region
      $region9: #{tpu_custom_call.1} parent=5 // pred_check
        _
      $region10: #{tpu_custom_call.1} parent=5 // pred_check_branch
        %353 = sbr.rel (%p350) target = $region12
      $region11: #{tpu_custom_call.1} parent=5 // pred_region
        %s354 = ssub.s32 %s26, 1
        // Predicated region
        $region13: #{tpu_custom_call.1} parent=11 // pred_check
          %p355 = pneg %p99
        $region14: #{tpu_custom_call.1} parent=11 // pred_check_branch
          %357 = sbr.rel (%p355) target = $region16
        $region15: #{tpu_custom_call.1} parent=11 // pred_region
          _
        $region16: #{tpu_custom_call.1} parent=11 // pred_fallthru
          _
        // Predicated region
        $region17: #{tpu_custom_call.1} parent=11 // pred_check
          %p358 = pneg %p120
        $region18: #{tpu_custom_call.1} parent=11 // pred_check_branch
          %360 = sbr.rel (%p358) target = $region20
        $region19: #{tpu_custom_call.1} parent=11 // pred_region
          _
        $region20: #{tpu_custom_call.1} parent=11 // pred_fallthru
          _
        // Predicated region
        $region21: #{tpu_custom_call.1} parent=11 // pred_check
          %p361 = pneg %p141
        $region22: #{tpu_custom_call.1} parent=11 // pred_check_branch
          %363 = sbr.rel (%p361) target = $region24
        $region23: #{tpu_custom_call.1} parent=11 // pred_region
          _
        $region24: #{tpu_custom_call.1} parent=11 // pred_fallthru
          _
        // Predicated region
        $region25: #{tpu_custom_call.1} parent=11 // pred_check
          %p364 = pneg %p162
        $region26: #{tpu_custom_call.1} parent=11 // pred_check_branch
          %366 = sbr.rel (%p364) target = $region28
        $region27: #{tpu_custom_call.1} parent=11 // pred_region
          _
        $region28: #{tpu_custom_call.1} parent=11 // pred_fallthru
          _
        // Predicated region
        $region29: #{tpu_custom_call.1} parent=11 // pred_check
          %p367 = pneg %p183
        $region30: #{tpu_custom_call.1} parent=11 // pred_check_branch
          %369 = sbr.rel (%p367) target = $region32
        $region31: #{tpu_custom_call.1} parent=11 // pred_region
          _
        $region32: #{tpu_custom_call.1} parent=11 // pred_fallthru
          _
        // Predicated region
        $region33: #{tpu_custom_call.1} parent=11 // pred_check
          %p370 = pneg %p204
        $region34: #{tpu_custom_call.1} parent=11 // pred_check_branch
          %372 = sbr.rel (%p370) target = $region36
        $region35: #{tpu_custom_call.1} parent=11 // pred_region
          _
        $region36: #{tpu_custom_call.1} parent=11 // pred_fallthru
          _
        // Predicated region
        $region37: #{tpu_custom_call.1} parent=11 // pred_check
          %p373 = pneg %p225
        $region38: #{tpu_custom_call.1} parent=11 // pred_check_branch
          %375 = sbr.rel (%p373) target = $region40
        $region39: #{tpu_custom_call.1} parent=11 // pred_region
          _
        $region40: #{tpu_custom_call.1} parent=11 // pred_fallthru
          _
        // Predicated region
        $region41: #{tpu_custom_call.1} parent=11 // pred_check
          %p376 = pneg %p246
        $region42: #{tpu_custom_call.1} parent=11 // pred_check_branch
          %378 = sbr.rel (%p376) target = $region44
        $region43: #{tpu_custom_call.1} parent=11 // pred_region
          _
        $region44: #{tpu_custom_call.1} parent=11 // pred_fallthru
          _
        // Predicated region
        $region45: #{tpu_custom_call.1} parent=11 // pred_check
          %p379 = pneg %p267
        $region46: #{tpu_custom_call.1} parent=11 // pred_check_branch
          %381 = sbr.rel (%p379) target = $region48
        $region47: #{tpu_custom_call.1} parent=11 // pred_region
          _
        $region48: #{tpu_custom_call.1} parent=11 // pred_fallthru
          _
        // Predicated region
        $region49: #{tpu_custom_call.1} parent=11 // pred_check
          %p382 = pneg %p288
        $region50: #{tpu_custom_call.1} parent=11 // pred_check_branch
          %384 = sbr.rel (%p382) target = $region52
        $region51: #{tpu_custom_call.1} parent=11 // pred_region
          _
        $region52: #{tpu_custom_call.1} parent=11 // pred_fallthru
          _
      $region12: #{tpu_custom_call.1} parent=5 // pred_fallthru
        _
      %p385 = scmp.lt.s32.totalorder %s26, 2
      // Predicated region
      $region53: #{tpu_custom_call.1} parent=5 // pred_check
        %p386 = pneg %p385
      $region54: #{tpu_custom_call.1} parent=5 // pred_check_branch
        %388 = sbr.rel (%p386) target = $region56
      $region55: #{tpu_custom_call.1} parent=5 // pred_region
        // Predicated region
        $region57: #{tpu_custom_call.1} parent=55 // pred_check
          %p389 = pneg %p46
        $region58: #{tpu_custom_call.1} parent=55 // pred_check_branch
          %391 = sbr.rel (%p389) target = $region60
        $region59: #{tpu_custom_call.1} parent=55 // pred_region
          %p392 = scmp.lt.s32.totalorder %s26, 1
          %s393 = scalar_select %p392, %s26, 1
          %s394 = smul.addr %s393, 8
          %s395 = scalar_lea.vmem %s0, %s394
        $region60: #{tpu_custom_call.1} parent=55 // pred_fallthru
          _
        // Predicated region
        $region61: #{tpu_custom_call.1} parent=55 // pred_check
          %p396 = pneg %p72
        $region62: #{tpu_custom_call.1} parent=55 // pred_check_branch
          %398 = sbr.rel (%p396) target = $region64
        $region63: #{tpu_custom_call.1} parent=55 // pred_region
          %p399 = scmp.lt.s32.totalorder %s26, 1
          %s400 = scalar_select %p399, %s26, 1
          %s401 = smul.addr %s400, 2
          %s402 = scalar_lea.vmem %s1, %s401
        $region64: #{tpu_custom_call.1} parent=55 // pred_fallthru
          _
      $region56: #{tpu_custom_call.1} parent=5 // pred_fallthru
        _
      %p403 = scmp.le.s32.totalorder 1, %s26
      %p404 = scmp.lt.s32.totalorder %s26, 3
      %p405 = pnand %p403, %p404
      %p406 = pneg %p405
      // Predicated region
      $region65: #{tpu_custom_call.1} parent=5 // pred_check
        _
      $region66: #{tpu_custom_call.1} parent=5 // pred_check_branch
        %408 = sbr.rel (%p405) target = $region68
      $region67: #{tpu_custom_call.1} parent=5 // pred_region
        %s409 = ssub.s32 %s26, 1
        %p410 = scmp.lt.s32.totalorder %s31, 1
        %s411 = scalar_select %p410, %s31, 1
        %s412 = smul.addr %s411, 8
        %s413 = scalar_lea.vmem %s0, %s412
        %p414 = pneg %p52
        %p415 = pneg %p49
        %p416 = scmp.lt.s32.totalorder %s31, 1
        %s417 = scalar_select %p416, %s31, 1
        %s418 = smul.addr %s417, 2
        %s419 = scalar_lea.vmem %s1, %s418
        %p420 = pneg %p78
        %p421 = pneg %p75
        %p422 = pneg %p99
        %p423 = pneg %p96
        %p424 = pneg %p120
        %p425 = pneg %p117
        %p426 = pneg %p141
        %p427 = pneg %p138
        %p428 = pneg %p162
        %p429 = pneg %p159
        %p430 = pneg %p183
        %p431 = pneg %p180
        %p432 = pneg %p204
        %p433 = pneg %p201
        %p434 = pneg %p225
        %p435 = pneg %p222
        %p436 = pneg %p246
        %p437 = pneg %p243
        %p438 = pneg %p267
        %p439 = pneg %p264
        %p440 = pneg %p288
        %p441 = pneg %p285
        %p442 = pneg %p314
        %p443 = pneg %p311
        %s444 = sand.u32 %s301, 1
        %s445 = scalar_lea.sflag [#allocation3], %s444
        %s446 = sand.u32 %s301, 1
        %s447 = smul.addr %s446, 8
        %s448 = scalar_lea.vmem [#allocation2], %s447
        %p449 = pneg %p340
        %p450 = pneg %p337
        %s451 = sand.u32 %s327, 1
        %s452 = scalar_lea.sflag [#allocation5], %s451
        %s453 = sand.u32 %s327, 1
        %s454 = smul.addr %s453, 32
        %s455 = scalar_lea.vmem [#allocation4], %s454
        %p456 = scmp.lt.s32.totalorder %s31, 1
        %s457 = scalar_select %p456, %s31, 1
        %s458 = smul.addr %s457, 8
        %s459 = scalar_lea.vmem %s0, %s458
        %p460 = scmp.lt.s32.totalorder %s31, 1
        %s461 = scalar_select %p460, %s31, 1
        %s462 = smul.addr %s461, 2
        %s463 = scalar_lea.vmem %s1, %s462
        %v466 = vld [vmem:[%s459] sm:$0xff]
        %v467 = vld [vmem:[%s463] sm:$0x3]
        %vm468 = vnez %v467
        %v469 = vld [vmem:[%s2] sm:$0xff]
        %v470 = vld [vmem:[%s2 + $0x8] sm:$0xff]
        %v471 = vld [vmem:[%s2 + $0x10] sm:$0xff]
        %v472 = vld [vmem:[%s2 + $0x18] sm:$0xff]
        %v473 = vld [vmem:[%s3] sm:$0x1]
        %v475 = vperm.slane %v473, 0
        %vm477 = vcmask 261120
        %v479 = vsel %vm477, %v466, 0
        %481 = vmatpush.msra.mxu0 0.0
        %482 = vmatpush.msra.mxu0 0.0
        %483 = vmatpush.msra.mxu0 0.0
        %484 = vmatpush.msra.mxu0 0.0
        %485 = vmatpush.msra.mxu0 0.0
        %486 = vmatpush.msra.mxu0 0.0
        %487 = vmatpush.msra.mxu0 0.0
        %488 = vmatpush.msra.mxu0 0.0
        %489 = vmatpush.msra.mxu0 0.0
        %490 = vmatpush.msra.mxu0 0.0
        %491 = vmatpush.msra.mxu0 0.0
        %492 = vmatpush.msra.mxu0 0.0
        %493 = vmatpush.msra.mxu0 %v472
        %494 = vmatpush.msra.mxu0 %v471
        %495 = vmatpush.msra.mxu0 %v470
        %496 = vmatpush.msra.mxu0 %v469
        %497 = vmatmul.f32.gmra.mxu0 %v479
        %v498 = vpop.f32.mrf.mxu0
        %v499 = vadd.f32 %v475, %v498
        %500 = vdwg.mxu0
        %v501 = vld [vmem:[%s4] sm:$0xff]
        %v502 = vld [vmem:[%s4 + $0x8] sm:$0xff]
        %v503 = vld [vmem:[%s4 + $0x10] sm:$0xff]
        %v504 = vld [vmem:[%s4 + $0x18] sm:$0xff]
        %v505 = vld [vmem:[%s5] sm:$0x1]
        %v507 = vperm.slane %v505, 0
        %509 = vmatpush.msra.mxu0 0.0
        %510 = vmatpush.msra.mxu0 0.0
        %511 = vmatpush.msra.mxu0 0.0
        %512 = vmatpush.msra.mxu0 0.0
        %513 = vmatpush.msra.mxu0 0.0
        %514 = vmatpush.msra.mxu0 0.0
        %515 = vmatpush.msra.mxu0 0.0
        %516 = vmatpush.msra.mxu0 0.0
        %517 = vmatpush.msra.mxu0 0.0
        %518 = vmatpush.msra.mxu0 0.0
        %519 = vmatpush.msra.mxu0 0.0
        %520 = vmatpush.msra.mxu0 0.0
        %521 = vmatpush.msra.mxu0 %v504
        %522 = vmatpush.msra.mxu0 %v503
        %523 = vmatpush.msra.mxu0 %v502
        %524 = vmatpush.msra.mxu0 %v501
        %525 = vmatmul.f32.gmra.mxu0 %v479
        %v526 = vpop.f32.mrf.mxu0
        %v527 = vadd.f32 %v507, %v526
        %528 = vdwg.mxu0
        %v529 = vld [vmem:[%s6] sm:$0xff]
        %v530 = vld [vmem:[%s6 + $0x8] sm:$0xff]
        %v531 = vld [vmem:[%s6 + $0x10] sm:$0xff]
        %v532 = vld [vmem:[%s6 + $0x18] sm:$0xff]
        %v533 = vld [vmem:[%s7] sm:$0x1]
        %v535 = vperm.slane %v533, 0
        %537 = vmatpush.msra.mxu0 0.0
        %538 = vmatpush.msra.mxu0 0.0
        %539 = vmatpush.msra.mxu0 0.0
        %540 = vmatpush.msra.mxu0 0.0
        %541 = vmatpush.msra.mxu0 0.0
        %542 = vmatpush.msra.mxu0 0.0
        %543 = vmatpush.msra.mxu0 0.0
        %544 = vmatpush.msra.mxu0 0.0
        %545 = vmatpush.msra.mxu0 0.0
        %546 = vmatpush.msra.mxu0 0.0
        %547 = vmatpush.msra.mxu0 0.0
        %548 = vmatpush.msra.mxu0 0.0
        %549 = vmatpush.msra.mxu0 %v532
        %550 = vmatpush.msra.mxu0 %v531
        %551 = vmatpush.msra.mxu0 %v530
        %552 = vmatpush.msra.mxu0 %v529
        %553 = vmatmul.f32.gmra.mxu0 %v479
        %v554 = vpop.f32.mrf.mxu0
        %v555 = vadd.f32 %v535, %v554
        %556 = vdwg.mxu0
        %v557 = vmul.f32 %v499, 0.25
        %vm558 = vcmask 130048
        %v560 = vsel %vm558, %v557, 0
        %v563 = vsel %vm558, %v527, 0
        %565 = vmatpush.xpose.msra.mxu0 0.0
        %566 = vmatpush.xpose.msra.mxu0 0.0
        %567 = vmatpush.xpose.msra.mxu0 0.0
        %568 = vmatpush.xpose.msra.mxu0 0.0
        %569 = vmatpush.xpose.msra.mxu0 0.0
        %570 = vmatpush.xpose.msra.mxu0 0.0
        %571 = vmatpush.xpose.msra.mxu0 0.0
        %572 = vmatpush.xpose.msra.mxu0 0.0
        %573 = vmatpush.xpose.msra.mxu0 0.0
        %574 = vmatpush.xpose.msra.mxu0 0.0
        %575 = vmatpush.xpose.msra.mxu0 0.0
        %576 = vmatpush.xpose.msra.mxu0 0.0
        %577 = vmatpush.xpose.msra.mxu0 0.0
        %578 = vmatpush.xpose.msra.mxu0 0.0
        %579 = vmatpush.xpose.msra.mxu0 0.0
        %580 = vmatpush.xpose.msra.mxu0 %v563
        %581 = vmatmul.f32.gmra.mxu0 %v560
        %v582 = vpop.f32.mrf.mxu0
        %v583 = vadd.f32 0.0, %v582
        %584 = vdwg.mxu0
        %v585 = vsel %vm468, 16843009, 0
        %v586 = vunpack.c.0.s8 %v585
        %vm587 = vcmp.ne.s32.totalorder %v586, 0
        %v588 = vsel %vm587, -1e+09, %v583
        %vm589 = vcmask 64512
        %v590 = vsel %vm589, %v588, -inf
        %591 = vmax.xlane.f32.xlu0 %v590
        %v592 = vpop.xlane.xlu0 %591
        %v593 = vsub.f32 %v588, %v592
        %v594 = vmul.f32 %v593, 1.442695
        %v595 = vpow.pop %v594
        %v596 = vsel %vm589, %v595, 0.0
        %597 = vadd.xlane.f32.xlu0 %v596
        %v598 = vpop.xlane.xlu0 %597
        %v599 = vrcp.pop %v598
        %v600 = vmul.f32 %v595, %v599
        %601 = vst.msk [vmem:[%s455] sm:$0xff] %vm589, %v600
        %v603 = vsel %vm589, %v600, 0
        %605 = vmatpush.msra.mxu0 0.0
        %606 = vmatpush.msra.mxu0 0.0
        %607 = vmatpush.msra.mxu0 0.0
        %608 = vmatpush.msra.mxu0 0.0
        %609 = vmatpush.msra.mxu0 0.0
        %610 = vmatpush.msra.mxu0 0.0
        %611 = vmatpush.msra.mxu0 0.0
        %612 = vmatpush.msra.mxu0 0.0
        %613 = vmatpush.msra.mxu0 0.0
        %614 = vmatpush.msra.mxu0 0.0
        %615 = vmatpush.msra.mxu0 0.0
        %616 = vmatpush.msra.mxu0 0.0
        %617 = vmatpush.msra.mxu0 0.0
        %618 = vmatpush.msra.mxu0 0.0
        %619 = vmatpush.msra.mxu0 0.0
        %620 = vmatpush.msra.mxu0 %v555
        %621 = vmatmul.f32.gmra.mxu0 %v603
        %v622 = vpop.f32.mrf.mxu0
        %v623 = vadd.f32 0.0, %v622
        %624 = vdwg.mxu0
        %v625 = vld [vmem:[%s8] sm:$0xff]
        %v626 = vld [vmem:[%s8 + $0x8] sm:$0xff]
        %v627 = vld [vmem:[%s8 + $0x10] sm:$0xff]
        %v628 = vld [vmem:[%s8 + $0x18] sm:$0xff]
        %s629 = scalar_lea.vmem %s2, 32
        %v630 = vld [vmem:[%s629] sm:$0xff]
        %v631 = vld [vmem:[%s629 + $0x8] sm:$0xff]
        %v632 = vld [vmem:[%s629 + $0x10] sm:$0xff]
        %v633 = vld [vmem:[%s629 + $0x18] sm:$0xff]
        %s634 = scalar_lea.vmem %s3, 1
        %v635 = vld [vmem:[%s634] sm:$0x1]
        %v637 = vperm.slane %v635, 0
        %639 = vmatpush.msra.mxu0 0.0
        %640 = vmatpush.msra.mxu0 0.0
        %641 = vmatpush.msra.mxu0 0.0
        %642 = vmatpush.msra.mxu0 0.0
        %643 = vmatpush.msra.mxu0 0.0
        %644 = vmatpush.msra.mxu0 0.0
        %645 = vmatpush.msra.mxu0 0.0
        %646 = vmatpush.msra.mxu0 0.0
        %647 = vmatpush.msra.mxu0 0.0
        %648 = vmatpush.msra.mxu0 0.0
        %649 = vmatpush.msra.mxu0 0.0
        %650 = vmatpush.msra.mxu0 0.0
        %651 = vmatpush.msra.mxu0 %v633
        %652 = vmatpush.msra.mxu0 %v632
        %653 = vmatpush.msra.mxu0 %v631
        %654 = vmatpush.msra.mxu0 %v630
        %655 = vmatmul.f32.gmra.mxu0 %v479
        %v656 = vpop.f32.mrf.mxu0
        %v657 = vadd.f32 %v637, %v656
        %658 = vdwg.mxu0
        %s659 = scalar_lea.vmem %s4, 32
        %v660 = vld [vmem:[%s659] sm:$0xff]
        %v661 = vld [vmem:[%s659 + $0x8] sm:$0xff]
        %v662 = vld [vmem:[%s659 + $0x10] sm:$0xff]
        %v663 = vld [vmem:[%s659 + $0x18] sm:$0xff]
        %s664 = scalar_lea.vmem %s5, 1
        %v665 = vld [vmem:[%s664] sm:$0x1]
        %v667 = vperm.slane %v665, 0
        %669 = vmatpush.msra.mxu0 0.0
        %670 = vmatpush.msra.mxu0 0.0
        %671 = vmatpush.msra.mxu0 0.0
        %672 = vmatpush.msra.mxu0 0.0
        %673 = vmatpush.msra.mxu0 0.0
        %674 = vmatpush.msra.mxu0 0.0
        %675 = vmatpush.msra.mxu0 0.0
        %676 = vmatpush.msra.mxu0 0.0
        %677 = vmatpush.msra.mxu0 0.0
        %678 = vmatpush.msra.mxu0 0.0
        %679 = vmatpush.msra.mxu0 0.0
        %680 = vmatpush.msra.mxu0 0.0
        %681 = vmatpush.msra.mxu0 %v663
        %682 = vmatpush.msra.mxu0 %v662
        %683 = vmatpush.msra.mxu0 %v661
        %684 = vmatpush.msra.mxu0 %v660
        %685 = vmatmul.f32.gmra.mxu0 %v479
        %v686 = vpop.f32.mrf.mxu0
        %v687 = vadd.f32 %v667, %v686
        %688 = vdwg.mxu0
        %s689 = scalar_lea.vmem %s6, 32
        %v690 = vld [vmem:[%s689] sm:$0xff]
        %v691 = vld [vmem:[%s689 + $0x8] sm:$0xff]
        %v692 = vld [vmem:[%s689 + $0x10] sm:$0xff]
        %v693 = vld [vmem:[%s689 + $0x18] sm:$0xff]
        %s694 = scalar_lea.vmem %s7, 1
        %v695 = vld [vmem:[%s694] sm:$0x1]
        %v697 = vperm.slane %v695, 0
        %699 = vmatpush.msra.mxu0 0.0
        %700 = vmatpush.msra.mxu0 0.0
        %701 = vmatpush.msra.mxu0 0.0
        %702 = vmatpush.msra.mxu0 0.0
        %703 = vmatpush.msra.mxu0 0.0
        %704 = vmatpush.msra.mxu0 0.0
        %705 = vmatpush.msra.mxu0 0.0
        %706 = vmatpush.msra.mxu0 0.0
        %707 = vmatpush.msra.mxu0 0.0
        %708 = vmatpush.msra.mxu0 0.0
        %709 = vmatpush.msra.mxu0 0.0
        %710 = vmatpush.msra.mxu0 0.0
        %711 = vmatpush.msra.mxu0 %v693
        %712 = vmatpush.msra.mxu0 %v692
        %713 = vmatpush.msra.mxu0 %v691
        %714 = vmatpush.msra.mxu0 %v690
        %715 = vmatmul.f32.gmra.mxu0 %v479
        %v716 = vpop.f32.mrf.mxu0
        %v717 = vadd.f32 %v697, %v716
        %718 = vdwg.mxu0
        %v719 = vmul.f32 %v657, 0.25
        %v721 = vsel %vm558, %v719, 0
        %v724 = vsel %vm558, %v687, 0
        %726 = vmatpush.xpose.msra.mxu0 0.0
        %727 = vmatpush.xpose.msra.mxu0 0.0
        %728 = vmatpush.xpose.msra.mxu0 0.0
        %729 = vmatpush.xpose.msra.mxu0 0.0
        %730 = vmatpush.xpose.msra.mxu0 0.0
        %731 = vmatpush.xpose.msra.mxu0 0.0
        %732 = vmatpush.xpose.msra.mxu0 0.0
        %733 = vmatpush.xpose.msra.mxu0 0.0
        %734 = vmatpush.xpose.msra.mxu0 0.0
        %735 = vmatpush.xpose.msra.mxu0 0.0
        %736 = vmatpush.xpose.msra.mxu0 0.0
        %737 = vmatpush.xpose.msra.mxu0 0.0
        %738 = vmatpush.xpose.msra.mxu0 0.0
        %739 = vmatpush.xpose.msra.mxu0 0.0
        %740 = vmatpush.xpose.msra.mxu0 0.0
        %741 = vmatpush.xpose.msra.mxu0 %v724
        %742 = vmatmul.f32.gmra.mxu0 %v721
        %v743 = vpop.f32.mrf.mxu0
        %v744 = vadd.f32 0.0, %v743
        %745 = vdwg.mxu0
        %v746 = vsel %vm587, -1e+09, %v744
        %v747 = vsel %vm589, %v746, -inf
        %748 = vmax.xlane.f32.xlu0 %v747
        %v749 = vpop.xlane.xlu0 %748
        %v750 = vsub.f32 %v746, %v749
        %v751 = vmul.f32 %v750, 1.442695
        %v752 = vpow.pop %v751
        %v753 = vsel %vm589, %v752, 0.0
        %754 = vadd.xlane.f32.xlu0 %v753
        %v755 = vpop.xlane.xlu0 %754
        %v756 = vrcp.pop %v755
        %v757 = vmul.f32 %v752, %v756
        %s758 = scalar_lea.vmem %s455, 8 [#allocation4]
        %759 = vst.msk [vmem:[%s758] sm:$0xff] %vm589, %v757
        %v761 = vsel %vm589, %v757, 0
        %763 = vmatpush.msra.mxu0 0.0
        %764 = vmatpush.msra.mxu0 0.0
        %765 = vmatpush.msra.mxu0 0.0
        %766 = vmatpush.msra.mxu0 0.0
        %767 = vmatpush.msra.mxu0 0.0
        %768 = vmatpush.msra.mxu0 0.0
        %769 = vmatpush.msra.mxu0 0.0
        %770 = vmatpush.msra.mxu0 0.0
        %771 = vmatpush.msra.mxu0 0.0
        %772 = vmatpush.msra.mxu0 0.0
        %773 = vmatpush.msra.mxu0 0.0
        %774 = vmatpush.msra.mxu0 0.0
        %775 = vmatpush.msra.mxu0 0.0
        %776 = vmatpush.msra.mxu0 0.0
        %777 = vmatpush.msra.mxu0 0.0
        %778 = vmatpush.msra.mxu0 %v717
        %779 = vmatmul.f32.gmra.mxu0 %v761
        %v780 = vpop.f32.mrf.mxu0
        %v781 = vadd.f32 0.0, %v780
        %782 = vdwg.mxu0
        %s783 = scalar_lea.vmem %s8, 32
        %v784 = vld [vmem:[%s783] sm:$0xff]
        %v785 = vld [vmem:[%s783 + $0x8] sm:$0xff]
        %v786 = vld [vmem:[%s783 + $0x10] sm:$0xff]
        %v787 = vld [vmem:[%s783 + $0x18] sm:$0xff]
        %v789 = vsel %vm477, %v781, 0
        %791 = vmatpush.msra.mxu0 0.0
        %792 = vmatpush.msra.mxu0 0.0
        %793 = vmatpush.msra.mxu0 0.0
        %794 = vmatpush.msra.mxu0 0.0
        %795 = vmatpush.msra.mxu0 0.0
        %796 = vmatpush.msra.mxu0 0.0
        %797 = vmatpush.msra.mxu0 0.0
        %798 = vmatpush.msra.mxu0 0.0
        %799 = vmatpush.msra.mxu0 0.0
        %800 = vmatpush.msra.mxu0 0.0
        %801 = vmatpush.msra.mxu0 0.0
        %802 = vmatpush.msra.mxu0 0.0
        %803 = vmatpush.msra.mxu0 %v787
        %804 = vmatpush.msra.mxu0 %v786
        %805 = vmatpush.msra.mxu0 %v785
        %806 = vmatpush.msra.mxu0 %v784
        %807 = vmatmul.f32.gmra.mxu0 %v789
        %v808 = vpop.f32.mrf.mxu0
        %v809 = vadd.f32 0.0, %v808
        %810 = vdwg.mxu0
        %v812 = vsel %vm477, %v623, 0
        %814 = vmatpush.msra.mxu0 0.0
        %815 = vmatpush.msra.mxu0 0.0
        %816 = vmatpush.msra.mxu0 0.0
        %817 = vmatpush.msra.mxu0 0.0
        %818 = vmatpush.msra.mxu0 0.0
        %819 = vmatpush.msra.mxu0 0.0
        %820 = vmatpush.msra.mxu0 0.0
        %821 = vmatpush.msra.mxu0 0.0
        %822 = vmatpush.msra.mxu0 0.0
        %823 = vmatpush.msra.mxu0 0.0
        %824 = vmatpush.msra.mxu0 0.0
        %825 = vmatpush.msra.mxu0 0.0
        %826 = vmatpush.msra.mxu0 %v628
        %827 = vmatpush.msra.mxu0 %v627
        %828 = vmatpush.msra.mxu0 %v626
        %829 = vmatpush.msra.mxu0 %v625
        %830 = vmatmul.f32.gmra.mxu0 %v812
        %v831 = vpop.f32.mrf.mxu0
        %v832 = vadd.f32 %v809, %v831
        %833 = vdwg.mxu0
        %s834 = scalar_lea.vmem %s2, 64
        %v835 = vld [vmem:[%s834] sm:$0xff]
        %v836 = vld [vmem:[%s834 + $0x8] sm:$0xff]
        %v837 = vld [vmem:[%s834 + $0x10] sm:$0xff]
        %v838 = vld [vmem:[%s834 + $0x18] sm:$0xff]
        %s839 = scalar_lea.vmem %s3, 2
        %v840 = vld [vmem:[%s839] sm:$0x1]
        %v842 = vperm.slane %v840, 0
        %844 = vmatpush.msra.mxu0 0.0
        %845 = vmatpush.msra.mxu0 0.0
        %846 = vmatpush.msra.mxu0 0.0
        %847 = vmatpush.msra.mxu0 0.0
        %848 = vmatpush.msra.mxu0 0.0
        %849 = vmatpush.msra.mxu0 0.0
        %850 = vmatpush.msra.mxu0 0.0
        %851 = vmatpush.msra.mxu0 0.0
        %852 = vmatpush.msra.mxu0 0.0
        %853 = vmatpush.msra.mxu0 0.0
        %854 = vmatpush.msra.mxu0 0.0
        %855 = vmatpush.msra.mxu0 0.0
        %856 = vmatpush.msra.mxu0 %v838
        %857 = vmatpush.msra.mxu0 %v837
        %858 = vmatpush.msra.mxu0 %v836
        %859 = vmatpush.msra.mxu0 %v835
        %860 = vmatmul.f32.gmra.mxu0 %v479
        %v861 = vpop.f32.mrf.mxu0
        %v862 = vadd.f32 %v842, %v861
        %863 = vdwg.mxu0
        %s864 = scalar_lea.vmem %s4, 64
        %v865 = vld [vmem:[%s864] sm:$0xff]
        %v866 = vld [vmem:[%s864 + $0x8] sm:$0xff]
        %v867 = vld [vmem:[%s864 + $0x10] sm:$0xff]
        %v868 = vld [vmem:[%s864 + $0x18] sm:$0xff]
        %s869 = scalar_lea.vmem %s5, 2
        %v870 = vld [vmem:[%s869] sm:$0x1]
        %v872 = vperm.slane %v870, 0
        %874 = vmatpush.msra.mxu0 0.0
        %875 = vmatpush.msra.mxu0 0.0
        %876 = vmatpush.msra.mxu0 0.0
        %877 = vmatpush.msra.mxu0 0.0
        %878 = vmatpush.msra.mxu0 0.0
        %879 = vmatpush.msra.mxu0 0.0
        %880 = vmatpush.msra.mxu0 0.0
        %881 = vmatpush.msra.mxu0 0.0
        %882 = vmatpush.msra.mxu0 0.0
        %883 = vmatpush.msra.mxu0 0.0
        %884 = vmatpush.msra.mxu0 0.0
        %885 = vmatpush.msra.mxu0 0.0
        %886 = vmatpush.msra.mxu0 %v868
        %887 = vmatpush.msra.mxu0 %v867
        %888 = vmatpush.msra.mxu0 %v866
        %889 = vmatpush.msra.mxu0 %v865
        %890 = vmatmul.f32.gmra.mxu0 %v479
        %v891 = vpop.f32.mrf.mxu0
        %v892 = vadd.f32 %v872, %v891
        %893 = vdwg.mxu0
        %s894 = scalar_lea.vmem %s6, 64
        %v895 = vld [vmem:[%s894] sm:$0xff]
        %v896 = vld [vmem:[%s894 + $0x8] sm:$0xff]
        %v897 = vld [vmem:[%s894 + $0x10] sm:$0xff]
        %v898 = vld [vmem:[%s894 + $0x18] sm:$0xff]
        %s899 = scalar_lea.vmem %s7, 2
        %v900 = vld [vmem:[%s899] sm:$0x1]
        %v902 = vperm.slane %v900, 0
        %904 = vmatpush.msra.mxu0 0.0
        %905 = vmatpush.msra.mxu0 0.0
        %906 = vmatpush.msra.mxu0 0.0
        %907 = vmatpush.msra.mxu0 0.0
        %908 = vmatpush.msra.mxu0 0.0
        %909 = vmatpush.msra.mxu0 0.0
        %910 = vmatpush.msra.mxu0 0.0
        %911 = vmatpush.msra.mxu0 0.0
        %912 = vmatpush.msra.mxu0 0.0
        %913 = vmatpush.msra.mxu0 0.0
        %914 = vmatpush.msra.mxu0 0.0
        %915 = vmatpush.msra.mxu0 0.0
        %916 = vmatpush.msra.mxu0 %v898
        %917 = vmatpush.msra.mxu0 %v897
        %918 = vmatpush.msra.mxu0 %v896
        %919 = vmatpush.msra.mxu0 %v895
        %920 = vmatmul.f32.gmra.mxu0 %v479
        %v921 = vpop.f32.mrf.mxu0
        %v922 = vadd.f32 %v902, %v921
        %923 = vdwg.mxu0
        %v924 = vmul.f32 %v862, 0.25
        %v926 = vsel %vm558, %v924, 0
        %v929 = vsel %vm558, %v892, 0
        %931 = vmatpush.xpose.msra.mxu0 0.0
        %932 = vmatpush.xpose.msra.mxu0 0.0
        %933 = vmatpush.xpose.msra.mxu0 0.0
        %934 = vmatpush.xpose.msra.mxu0 0.0
        %935 = vmatpush.xpose.msra.mxu0 0.0
        %936 = vmatpush.xpose.msra.mxu0 0.0
        %937 = vmatpush.xpose.msra.mxu0 0.0
        %938 = vmatpush.xpose.msra.mxu0 0.0
        %939 = vmatpush.xpose.msra.mxu0 0.0
        %940 = vmatpush.xpose.msra.mxu0 0.0
        %941 = vmatpush.xpose.msra.mxu0 0.0
        %942 = vmatpush.xpose.msra.mxu0 0.0
        %943 = vmatpush.xpose.msra.mxu0 0.0
        %944 = vmatpush.xpose.msra.mxu0 0.0
        %945 = vmatpush.xpose.msra.mxu0 0.0
        %946 = vmatpush.xpose.msra.mxu0 %v929
        %947 = vmatmul.f32.gmra.mxu0 %v926
        %v948 = vpop.f32.mrf.mxu0
        %v949 = vadd.f32 0.0, %v948
        %950 = vdwg.mxu0
        %v951 = vsel %vm587, -1e+09, %v949
        %v952 = vsel %vm589, %v951, -inf
        %953 = vmax.xlane.f32.xlu0 %v952
        %v954 = vpop.xlane.xlu0 %953
        %v955 = vsub.f32 %v951, %v954
        %v956 = vmul.f32 %v955, 1.442695
        %v957 = vpow.pop %v956
        %v958 = vsel %vm589, %v957, 0.0
        %959 = vadd.xlane.f32.xlu0 %v958
        %v960 = vpop.xlane.xlu0 %959
        %v961 = vrcp.pop %v960
        %v962 = vmul.f32 %v957, %v961
        %s963 = scalar_lea.vmem %s455, 16 [#allocation4]
        %964 = vst.msk [vmem:[%s963] sm:$0xff] %vm589, %v962
        %v966 = vsel %vm589, %v962, 0
        %968 = vmatpush.msra.mxu0 0.0
        %969 = vmatpush.msra.mxu0 0.0
        %970 = vmatpush.msra.mxu0 0.0
        %971 = vmatpush.msra.mxu0 0.0
        %972 = vmatpush.msra.mxu0 0.0
        %973 = vmatpush.msra.mxu0 0.0
        %974 = vmatpush.msra.mxu0 0.0
        %975 = vmatpush.msra.mxu0 0.0
        %976 = vmatpush.msra.mxu0 0.0
        %977 = vmatpush.msra.mxu0 0.0
        %978 = vmatpush.msra.mxu0 0.0
        %979 = vmatpush.msra.mxu0 0.0
        %980 = vmatpush.msra.mxu0 0.0
        %981 = vmatpush.msra.mxu0 0.0
        %982 = vmatpush.msra.mxu0 0.0
        %983 = vmatpush.msra.mxu0 %v922
        %984 = vmatmul.f32.gmra.mxu0 %v966
        %v985 = vpop.f32.mrf.mxu0
        %v986 = vadd.f32 0.0, %v985
        %987 = vdwg.mxu0
        %s988 = scalar_lea.vmem %s8, 64
        %v989 = vld [vmem:[%s988] sm:$0xff]
        %v990 = vld [vmem:[%s988 + $0x8] sm:$0xff]
        %v991 = vld [vmem:[%s988 + $0x10] sm:$0xff]
        %v992 = vld [vmem:[%s988 + $0x18] sm:$0xff]
        %v994 = vsel %vm477, %v986, 0
        %996 = vmatpush.msra.mxu0 0.0
        %997 = vmatpush.msra.mxu0 0.0
        %998 = vmatpush.msra.mxu0 0.0
        %999 = vmatpush.msra.mxu0 0.0
        %1000 = vmatpush.msra.mxu0 0.0
        %1001 = vmatpush.msra.mxu0 0.0
        %1002 = vmatpush.msra.mxu0 0.0
        %1003 = vmatpush.msra.mxu0 0.0
        %1004 = vmatpush.msra.mxu0 0.0
        %1005 = vmatpush.msra.mxu0 0.0
        %1006 = vmatpush.msra.mxu0 0.0
        %1007 = vmatpush.msra.mxu0 0.0
        %1008 = vmatpush.msra.mxu0 %v992
        %1009 = vmatpush.msra.mxu0 %v991
        %1010 = vmatpush.msra.mxu0 %v990
        %1011 = vmatpush.msra.mxu0 %v989
        %1012 = vmatmul.f32.gmra.mxu0 %v994
        %v1013 = vpop.f32.mrf.mxu0
        %v1014 = vadd.f32 0.0, %v1013
        %1015 = vdwg.mxu0
        %v1016 = vadd.f32 %v832, %v1014
        %s1017 = scalar_lea.vmem %s2, 96
        %v1018 = vld [vmem:[%s1017] sm:$0xff]
        %v1019 = vld [vmem:[%s1017 + $0x8] sm:$0xff]
        %v1020 = vld [vmem:[%s1017 + $0x10] sm:$0xff]
        %v1021 = vld [vmem:[%s1017 + $0x18] sm:$0xff]
        %s1022 = scalar_lea.vmem %s3, 3
        %v1023 = vld [vmem:[%s1022] sm:$0x1]
        %v1025 = vperm.slane %v1023, 0
        %1027 = vmatpush.msra.mxu0 0.0
        %1028 = vmatpush.msra.mxu0 0.0
        %1029 = vmatpush.msra.mxu0 0.0
        %1030 = vmatpush.msra.mxu0 0.0
        %1031 = vmatpush.msra.mxu0 0.0
        %1032 = vmatpush.msra.mxu0 0.0
        %1033 = vmatpush.msra.mxu0 0.0
        %1034 = vmatpush.msra.mxu0 0.0
        %1035 = vmatpush.msra.mxu0 0.0
        %1036 = vmatpush.msra.mxu0 0.0
        %1037 = vmatpush.msra.mxu0 0.0
        %1038 = vmatpush.msra.mxu0 0.0
        %1039 = vmatpush.msra.mxu0 %v1021
        %1040 = vmatpush.msra.mxu0 %v1020
        %1041 = vmatpush.msra.mxu0 %v1019
        %1042 = vmatpush.msra.mxu0 %v1018
        %1043 = vmatmul.f32.gmra.mxu0 %v479
        %v1044 = vpop.f32.mrf.mxu0
        %v1045 = vadd.f32 %v1025, %v1044
        %1046 = vdwg.mxu0
        %s1047 = scalar_lea.vmem %s4, 96
        %v1048 = vld [vmem:[%s1047] sm:$0xff]
        %v1049 = vld [vmem:[%s1047 + $0x8] sm:$0xff]
        %v1050 = vld [vmem:[%s1047 + $0x10] sm:$0xff]
        %v1051 = vld [vmem:[%s1047 + $0x18] sm:$0xff]
        %s1052 = scalar_lea.vmem %s5, 3
        %v1053 = vld [vmem:[%s1052] sm:$0x1]
        %v1055 = vperm.slane %v1053, 0
        %1057 = vmatpush.msra.mxu0 0.0
        %1058 = vmatpush.msra.mxu0 0.0
        %1059 = vmatpush.msra.mxu0 0.0
        %1060 = vmatpush.msra.mxu0 0.0
        %1061 = vmatpush.msra.mxu0 0.0
        %1062 = vmatpush.msra.mxu0 0.0
        %1063 = vmatpush.msra.mxu0 0.0
        %1064 = vmatpush.msra.mxu0 0.0
        %1065 = vmatpush.msra.mxu0 0.0
        %1066 = vmatpush.msra.mxu0 0.0
        %1067 = vmatpush.msra.mxu0 0.0
        %1068 = vmatpush.msra.mxu0 0.0
        %1069 = vmatpush.msra.mxu0 %v1051
        %1070 = vmatpush.msra.mxu0 %v1050
        %1071 = vmatpush.msra.mxu0 %v1049
        %1072 = vmatpush.msra.mxu0 %v1048
        %1073 = vmatmul.f32.gmra.mxu0 %v479
        %v1074 = vpop.f32.mrf.mxu0
        %v1075 = vadd.f32 %v1055, %v1074
        %1076 = vdwg.mxu0
        %s1077 = scalar_lea.vmem %s6, 96
        %v1078 = vld [vmem:[%s1077] sm:$0xff]
        %v1079 = vld [vmem:[%s1077 + $0x8] sm:$0xff]
        %v1080 = vld [vmem:[%s1077 + $0x10] sm:$0xff]
        %v1081 = vld [vmem:[%s1077 + $0x18] sm:$0xff]
        %s1082 = scalar_lea.vmem %s7, 3
        %v1083 = vld [vmem:[%s1082] sm:$0x1]
        %v1085 = vperm.slane %v1083, 0
        %1087 = vmatpush.msra.mxu0 0.0
        %1088 = vmatpush.msra.mxu0 0.0
        %1089 = vmatpush.msra.mxu0 0.0
        %1090 = vmatpush.msra.mxu0 0.0
        %1091 = vmatpush.msra.mxu0 0.0
        %1092 = vmatpush.msra.mxu0 0.0
        %1093 = vmatpush.msra.mxu0 0.0
        %1094 = vmatpush.msra.mxu0 0.0
        %1095 = vmatpush.msra.mxu0 0.0
        %1096 = vmatpush.msra.mxu0 0.0
        %1097 = vmatpush.msra.mxu0 0.0
        %1098 = vmatpush.msra.mxu0 0.0
        %1099 = vmatpush.msra.mxu0 %v1081
        %1100 = vmatpush.msra.mxu0 %v1080
        %1101 = vmatpush.msra.mxu0 %v1079
        %1102 = vmatpush.msra.mxu0 %v1078
        %1103 = vmatmul.f32.gmra.mxu0 %v479
        %v1104 = vpop.f32.mrf.mxu0
        %v1105 = vadd.f32 %v1085, %v1104
        %1106 = vdwg.mxu0
        %v1107 = vmul.f32 %v1045, 0.25
        %v1109 = vsel %vm558, %v1107, 0
        %v1112 = vsel %vm558, %v1075, 0
        %1114 = vmatpush.xpose.msra.mxu0 0.0
        %1115 = vmatpush.xpose.msra.mxu0 0.0
        %1116 = vmatpush.xpose.msra.mxu0 0.0
        %1117 = vmatpush.xpose.msra.mxu0 0.0
        %1118 = vmatpush.xpose.msra.mxu0 0.0
        %1119 = vmatpush.xpose.msra.mxu0 0.0
        %1120 = vmatpush.xpose.msra.mxu0 0.0
        %1121 = vmatpush.xpose.msra.mxu0 0.0
        %1122 = vmatpush.xpose.msra.mxu0 0.0
        %1123 = vmatpush.xpose.msra.mxu0 0.0
        %1124 = vmatpush.xpose.msra.mxu0 0.0
        %1125 = vmatpush.xpose.msra.mxu0 0.0
        %1126 = vmatpush.xpose.msra.mxu0 0.0
        %1127 = vmatpush.xpose.msra.mxu0 0.0
        %1128 = vmatpush.xpose.msra.mxu0 0.0
        %1129 = vmatpush.xpose.msra.mxu0 %v1112
        %1130 = vmatmul.f32.gmra.mxu0 %v1109
        %v1131 = vpop.f32.mrf.mxu0
        %v1132 = vadd.f32 0.0, %v1131
        %1133 = vdwg.mxu0
        %v1134 = vsel %vm587, -1e+09, %v1132
        %v1135 = vsel %vm589, %v1134, -inf
        %1136 = vmax.xlane.f32.xlu0 %v1135
        %v1137 = vpop.xlane.xlu0 %1136
        %v1138 = vsub.f32 %v1134, %v1137
        %v1139 = vmul.f32 %v1138, 1.442695
        %v1140 = vpow.pop %v1139
        %v1141 = vsel %vm589, %v1140, 0.0
        %1142 = vadd.xlane.f32.xlu0 %v1141
        %v1143 = vpop.xlane.xlu0 %1142
        %v1144 = vrcp.pop %v1143
        %v1145 = vmul.f32 %v1140, %v1144
        %s1146 = scalar_lea.vmem %s455, 24 [#allocation4]
        %1147 = vst.msk [vmem:[%s1146] sm:$0xff] %vm589, %v1145
        %v1149 = vsel %vm589, %v1145, 0
        %1151 = vmatpush.msra.mxu0 0.0
        %1152 = vmatpush.msra.mxu0 0.0
        %1153 = vmatpush.msra.mxu0 0.0
        %1154 = vmatpush.msra.mxu0 0.0
        %1155 = vmatpush.msra.mxu0 0.0
        %1156 = vmatpush.msra.mxu0 0.0
        %1157 = vmatpush.msra.mxu0 0.0
        %1158 = vmatpush.msra.mxu0 0.0
        %1159 = vmatpush.msra.mxu0 0.0
        %1160 = vmatpush.msra.mxu0 0.0
        %1161 = vmatpush.msra.mxu0 0.0
        %1162 = vmatpush.msra.mxu0 0.0
        %1163 = vmatpush.msra.mxu0 0.0
        %1164 = vmatpush.msra.mxu0 0.0
        %1165 = vmatpush.msra.mxu0 0.0
        %1166 = vmatpush.msra.mxu0 %v1105
        %1167 = vmatmul.f32.gmra.mxu0 %v1149
        %v1168 = vpop.f32.mrf.mxu0
        %v1169 = vadd.f32 0.0, %v1168
        %1170 = vdwg.mxu0
        %s1171 = scalar_lea.vmem %s8, 96
        %v1172 = vld [vmem:[%s1171] sm:$0xff]
        %v1173 = vld [vmem:[%s1171 + $0x8] sm:$0xff]
        %v1174 = vld [vmem:[%s1171 + $0x10] sm:$0xff]
        %v1175 = vld [vmem:[%s1171 + $0x18] sm:$0xff]
        %v1177 = vsel %vm477, %v1169, 0
        %1179 = vmatpush.msra.mxu0 0.0
        %1180 = vmatpush.msra.mxu0 0.0
        %1181 = vmatpush.msra.mxu0 0.0
        %1182 = vmatpush.msra.mxu0 0.0
        %1183 = vmatpush.msra.mxu0 0.0
        %1184 = vmatpush.msra.mxu0 0.0
        %1185 = vmatpush.msra.mxu0 0.0
        %1186 = vmatpush.msra.mxu0 0.0
        %1187 = vmatpush.msra.mxu0 0.0
        %1188 = vmatpush.msra.mxu0 0.0
        %1189 = vmatpush.msra.mxu0 0.0
        %1190 = vmatpush.msra.mxu0 0.0
        %1191 = vmatpush.msra.mxu0 %v1175
        %1192 = vmatpush.msra.mxu0 %v1174
        %1193 = vmatpush.msra.mxu0 %v1173
        %1194 = vmatpush.msra.mxu0 %v1172
        %1195 = vmatmul.f32.gmra.mxu0 %v1177
        %v1196 = vpop.f32.mrf.mxu0
        %v1197 = vadd.f32 0.0, %v1196
        %1198 = vdwg.mxu0
        %v1199 = vadd.f32 %v1016, %v1197
        %v1200 = vadd.f32 %v466, %v1199
        %v1201 = vld [vmem:[%s9] sm:$0x1]
        %v1203 = vperm.slane %v1201, 0
        %v1205 = vadd.f32 %v1200, %v1203
        %v1206 = vsel %vm477, %v1205, 0.0
        %1207 = vadd.xlane.f32.xlu0 %v1206
        %v1208 = vpop.xlane.xlu0 %1207
        %v1209 = vrcp.pop 32.0
        %v1210 = vmul.f32 32.0, %v1209
        %v1211 = vsub.f32 1.0, %v1210
        %v1212 = vmul.f32 %v1209, %v1211
        %v1213 = vadd.f32 %v1209, %v1212
        %vm1214 = vweird.f32 %v1209
        %v1215 = vsel %vm1214, %v1209, %v1213
        %v1216 = vmul.f32 %v1208, %v1215
        %v1217 = vsub.f32 %v1205, %v1216
        %v1218 = vmul.f32 %v1217, %v1217
        %v1219 = vsel %vm477, %v1218, 0.0
        %1220 = vadd.xlane.f32.xlu0 %v1219
        %v1221 = vpop.xlane.xlu0 %1220
        %v1222 = vmul.f32 %v1221, %v1215
        %v1223 = vadd.f32 %v1222, 1e-05
        %v1224 = vrsqrt.pop %v1223
        %v1225 = vmul.f32 %v1224, %v1223
        %v1226 = vmul.f32 %v1225, %v1224
        %v1227 = vmul.f32 0.5, %v1226
        %v1228 = vsub.f32 1.5, %v1227
        %v1229 = vmul.f32 %v1224, %v1228
        %vm1230 = vweird.f32 %v1223
        %vm1231 = vweird.f32 %v1224
        %vm1232 = vmor %vm1230, %vm1231
        %v1233 = vsel %vm1232, %v1224, %v1229
        %v1234 = vmul.f32 %v1217, %v1233
        %v1235 = vld [vmem:[%s10] sm:$0x1]
        %v1237 = vperm.slane %v1235, 0
        %v1239 = vmul.f32 %v1234, %v1237
        %v1240 = vld [vmem:[%s11] sm:$0x1]
        %v1242 = vperm.slane %v1240, 0
        %v1244 = vadd.f32 %v1239, %v1242
        %1245 = vst.msk [vmem:[%s448] sm:$0xff] %vm477, %v1244
        %s1246 = sand.u32 %s301, 1
        %s1247 = scalar_lea.sflag [#allocation3], %s1246
        %s1248 = sand.u32 %s301, 1
        %s1249 = smul.addr %s1248, 8
        %s1250 = scalar_lea.vmem [#allocation2], %s1249
        %s1251 = sand.u32 %s327, 1
        %s1252 = scalar_lea.sflag [#allocation5], %s1251
        %s1253 = sand.u32 %s327, 1
        %s1254 = smul.addr %s1253, 32
        %s1255 = scalar_lea.vmem [#allocation4], %s1254
        // Predicated region
        $region69: #{tpu_custom_call.1} parent=67 // pred_check
          %p1256 = pneg %p311
        $region70: #{tpu_custom_call.1} parent=67 // pred_check_branch
          %1258 = sbr.rel (%p1256) target = $region72
        $region71: #{tpu_custom_call.1} parent=67 // pred_region
          %1260 = vsyncadd %s1247, 0
          %s1261 = smul.addr %s31, 8
          %s1262 = scalar_lea.hbm %s12, %s1261
          %s1264 = sshll.u32 %s1250, 4
          %s1265 = int_to_ptr.vmem [resolvable:$true] %s1264
          %s1266 = sshll.u32 %s1262, 4
          %s1267 = int_to_ptr.hbm [resolvable:$true] %s1266
          %1269 = dma.vmem_to_hbm [thread:$0]  %s1265, 128, %s1267, %s1247
        $region72: #{tpu_custom_call.1} parent=67 // pred_fallthru
          _
        // Predicated region
        $region73: #{tpu_custom_call.1} parent=67 // pred_check
          %p1270 = pneg %p337
        $region74: #{tpu_custom_call.1} parent=67 // pred_check_branch
          %1272 = sbr.rel (%p1270) target = $region76
        $region75: #{tpu_custom_call.1} parent=67 // pred_region
          %1274 = vsyncadd %s1252, 0
          %s1275 = smul.addr %s31, 4
          %s1276 = smul.addr %s1275, 8
          %s1277 = scalar_lea.hbm %s13, %s1276
          %s1278 = sshll.u32 %s1255, 4
          %s1279 = int_to_ptr.vmem [resolvable:$true] %s1278
          %s1280 = sshll.u32 %s1277, 4
          %s1281 = int_to_ptr.hbm [resolvable:$true] %s1280
          %1286 = dma.vmem_to_hbm [thread:$0]  %s1279, 512, %s1281, %s1252, 128, 128, 8
        $region76: #{tpu_custom_call.1} parent=67 // pred_fallthru
          _
      $region68: #{tpu_custom_call.1} parent=5 // pred_fallthru
        _
      %p1287 = scmp.le.s32.totalorder 2, %s26
      // Predicated region
      $region77: #{tpu_custom_call.1} parent=5 // pred_check
        %p1288 = pneg %p1287
      $region78: #{tpu_custom_call.1} parent=5 // pred_check_branch
        %1290 = sbr.rel (%p1288) target = $region80
      $region79: #{tpu_custom_call.1} parent=5 // pred_region
        %s1291 = ssub.s32 %s26, 2
        // Predicated region
        $region81: #{tpu_custom_call.1} parent=79 // pred_check
          %p1292 = pneg %p317
        $region82: #{tpu_custom_call.1} parent=79 // pred_check_branch
          %1294 = sbr.rel (%p1292) target = $region84
        $region83: #{tpu_custom_call.1} parent=79 // pred_region
          %s1295 = sand.u32 %s302, 1
          %s1296 = scalar_lea.sflag [#allocation3], %s1295
          %s1297 = sand.u32 %s302, 1
          %s1298 = smul.addr %s1297, 8
          %s1299 = scalar_lea.vmem [#allocation2], %s1298
          %1301 = dma.done %s1296, 128
        $region84: #{tpu_custom_call.1} parent=79 // pred_fallthru
          _
        // Predicated region
        $region85: #{tpu_custom_call.1} parent=79 // pred_check
          %p1302 = pneg %p343
        $region86: #{tpu_custom_call.1} parent=79 // pred_check_branch
          %1304 = sbr.rel (%p1302) target = $region88
        $region87: #{tpu_custom_call.1} parent=79 // pred_region
          %s1305 = sand.u32 %s328, 1
          %s1306 = scalar_lea.sflag [#allocation5], %s1305
          %s1307 = sand.u32 %s328, 1
          %s1308 = smul.addr %s1307, 32
          %s1309 = scalar_lea.vmem [#allocation4], %s1308
          %1311 = dma.done %s1306, 512
        $region88: #{tpu_custom_call.1} parent=79 // pred_fallthru
          _
      $region80: #{tpu_custom_call.1} parent=5 // pred_fallthru
        _
    $region6: #{tpu_custom_call.1} parent=1 // loop_footer
      %s30 = sadd.s32 1, %s26
    $region7: #{tpu_custom_call.1} parent=1 // loop_footer_branch
      %25 = sbr.rel target = $region3
    $region8: #{tpu_custom_call.1} parent=1 // loop_exit
      _
    %1312 = vsyncpa [#allocation3], 1
    %s1313 = scalar_lea.sflag [#allocation3], 1
    %1314 = vsyncpa %s1313, 1
    %1315 = vsyncpa [#allocation5], 1
    %s1316 = scalar_lea.sflag [#allocation5], 1
    %1317 = vsyncpa %s1316, 1

</llo_original>
